<compile_context>
chip_gen: v7x
topology: tpu7x:2x2x1
jax: 0.10.0
libtpu: 0.0.40
codegen_flags: <defaults>
</compile_context>

<pallas_src>
import jax
import jax.numpy as jnp
from jax.experimental import pallas as pl
from jax.experimental.pallas import tpu as pltpu


# ----------------------------------------------------------------------------
# Kernel 1: encoder block over BLOCK_B batch rows + in-kernel last-token gather.
# ----------------------------------------------------------------------------
def encoder_block_kernel(last_idx_ref,                       # SMEM int32[B] (scalar prefetch)
                         x_ref,                              # VMEM [Bt, S, H] f32
                         ln1g_ref, ln1b_ref, wqkv_ref, wo_ref,
                         ln2g_ref, ln2b_ref, w1_ref, b1_ref, w2_ref, b2_ref,
                         o_ref,                              # VMEM [Bt, S, H] f32
                         emb_ref):                           # VMEM [1, Bt, H] f32
    Bt, S, H = x_ref.shape
    x = x_ref[...].reshape(Bt * S, H)                        # flatten rows: MXU sees M = Bt*S

    def layernorm(v, g, b):                                  # f32 elementwise (v5e-safe)
        mu = jnp.mean(v, axis=-1, keepdims=True)
        var = jnp.mean((v - mu) ** 2, axis=-1, keepdims=True)
        return (v - mu) * jax.lax.rsqrt(var + 1e-5) * g + b

    def mm(a_f32, w_bf16):                                   # bf16 MXU, f32 accumulate
        return jax.lax.dot_general(a_f32.astype(jnp.bfloat16), w_bf16[...],
                                   (((1,), (0,)), ((), ())),
                                   preferred_element_type=jnp.float32)

    # --- self attention (single head, bidirectional) ---
    h = layernorm(x, ln1g_ref[...], ln1b_ref[...])
    qkv = mm(h, wqkv_ref)                                    # fused QKV: [Bt*S, 3H] f32
    q = qkv[:, 0 * H:1 * H].astype(jnp.bfloat16).reshape(Bt, S, H)
    k = qkv[:, 1 * H:2 * H].astype(jnp.bfloat16).reshape(Bt, S, H)
    v = qkv[:, 2 * H:3 * H].astype(jnp.bfloat16).reshape(Bt, S, H)

    # scores contract on the last axis of both q and k -> no explicit k transpose.
    s = jnp.einsum('bqd,bkd->bqk', q, k, preferred_element_type=jnp.float32)
    s = s * (1.0 / jnp.sqrt(jnp.float32(H)))
    s = s - jnp.max(s, axis=-1, keepdims=True)
    p = jnp.exp(s)
    p = p * pl.reciprocal(jnp.sum(p, axis=-1, keepdims=True), approx=True)
    attn = jnp.einsum('bqk,bkd->bqd', p.astype(jnp.bfloat16), v,
                      preferred_element_type=jnp.float32)    # [Bt, S, H] f32
    x = x + mm(attn.reshape(Bt * S, H), wo_ref)              # residual in f32

    # --- MLP ---
    h2 = layernorm(x, ln2g_ref[...], ln2b_ref[...])
    m = mm(h2, w1_ref) + b1_ref[...]
    m = jax.nn.gelu(m, approximate=True)                     # tanh GELU (EUP)
    x = x + mm(m, w2_ref) + b2_ref[...]

    o_ref[...] = x.reshape(Bt, S, H)

    # --- per-row last-non-pad-token embeddings (reference: output[i, last_indices[i], :])
    # gathered here while the tile is still resident -> no extra HBM read of [B,S,H].
    base = pl.program_id(0) * Bt
    for j in range(Bt):                                      # Bt is a small static constant
        idx = last_idx_ref[base + j]
        emb_ref[0, pl.ds(j, 1), :] = o_ref[j, pl.ds(idx, 1), :]


def _vmem_limit_bytes(tile_bytes, weights):
    wbytes = sum(int(w.size) * w.dtype.itemsize for w in weights)
    # weights (pipeline-buffered) + in/out activation tiles (double-buffered) + transient
    # compute scratch + headroom; clamped to stay under v7x's 64 MiB physical VMEM.
    need = 2 * wbytes + 4 * tile_bytes + 8 * tile_bytes + (4 << 20)
    return int(min(56 << 20, max(16 << 20, need)))


def encoder_forward(x, last_idx, params, block_b=2):
    """x: [B, S, H] f32, last_idx: int32[B] -> (model_output [B,S,H] f32, emb [B,H] f32)."""
    B, S, H = x.shape
    if B % block_b != 0:
        block_b = 1
    nb = B // block_b

    weight_names = ("ln1_g", "ln1_b", "w_qkv", "w_o",
                    "ln2_g", "ln2_b", "w1", "b1", "w2", "b2")
    weights = [params[n] for n in weight_names]

    in_specs = [pl.BlockSpec((block_b, S, H), lambda bi, li: (bi, 0, 0))]
    for w in weights:
        # Grid-invariant full-array weight blocks (all 2-D).
        # NOTE: at production H/FF also set pipeline_mode=pl.Buffered(1) here so the
        # grid-invariant weights are single-buffered (bf16 weights + single buffer keeps
        # the resident footprint under v7x's 64 MiB VMEM).
        in_specs.append(pl.BlockSpec(w.shape, lambda bi, li: (0, 0)))

    out_shapes = (jax.ShapeDtypeStruct((B, S, H), jnp.float32),
                  jax.ShapeDtypeStruct((nb, block_b, H), jnp.float32))
    out_specs = [pl.BlockSpec((block_b, S, H), lambda bi, li: (bi, 0, 0)),
                 pl.BlockSpec((1, block_b, H), lambda bi, li: (bi, 0, 0))]

    tile_bytes = block_b * S * H * 4
    fn = pl.pallas_call(
        encoder_block_kernel,
        out_shape=out_shapes,
        grid_spec=pltpu.PrefetchScalarGridSpec(
            num_scalar_prefetch=1,
            grid=(nb,),
            in_specs=in_specs,
            out_specs=out_specs,
        ),
        compiler_params=pltpu.CompilerParams(
            dimension_semantics=("parallel",),               # batch blocks -> 2 TCs on v7x
            vmem_limit_bytes=_vmem_limit_bytes(tile_bytes, weights)),
    )
    model_output, emb_blocks = fn(last_idx, x, *weights)
    return model_output, emb_blocks.reshape(B, H)


# ----------------------------------------------------------------------------
# Kernel 2: InfoNCE loss on the gathered per-row embeddings.
# ----------------------------------------------------------------------------
def infonce_kernel(midx_ref, emb_ref, loss_ref):
    emb = emb_ref[...]                                       # [B, H] f32
    B = emb.shape[0]
    summary = emb[0:1, :]                                    # output[0, last_indices[0], :]

    # dots via one MXU matmul (contract on H), instead of per-row XLU reductions.
    dots = jax.lax.dot_general(emb, summary, (((1,), (1,)), ((), ())),
                               preferred_element_type=jnp.float32)        # [B, 1]
    norms = jnp.sqrt(jnp.sum(emb * emb, axis=-1, keepdims=True))          # [B, 1]
    norm_s = norms[0:1, :]
    eps = 1e-8
    # torch.nn.CosineSimilarity: clamp each norm separately.
    cos = dots / (jnp.maximum(norm_s, eps) * jnp.maximum(norms, eps))
    e = jnp.exp(cos * (1.0 / 0.02))                                       # temp = 0.02

    midx = midx_ref[0]
    idx = jax.lax.broadcasted_iota(jnp.int32, (B, 1), 0)
    is_match = idx == midx
    is_nonmatch = jnp.logical_and(idx >= 1, jnp.logical_not(is_match))
    codists = jnp.sum(jnp.where(is_match, e, 0.0))
    nondists = jnp.sum(jnp.where(is_nonmatch, e, 0.0))
    loss_ref[0, 0] = -jnp.log(codists / (codists + nondists))


def infonce_loss(last_embeddings, matching_index):
    """last_embeddings: [B, H] f32, matching_index: int32[1] -> scalar f32."""
    out = pl.pallas_call(
        infonce_kernel,
        out_shape=jax.ShapeDtypeStruct((1, 1), jnp.float32),
        in_specs=[pl.BlockSpec(memory_space=pltpu.MemorySpace.SMEM),
                  pl.BlockSpec(memory_space=pltpu.MemorySpace.VMEM)],
        out_specs=pl.BlockSpec(memory_space=pltpu.MemorySpace.VMEM),
    )(matching_index, last_embeddings)
    return out[0, 0]


# ----------------------------------------------------------------------------
# Full module forward: (loss, model_output)
# ----------------------------------------------------------------------------
def retrieval_transformer_forward(input_ids, matching_index, last_indices, params,
                                  prebatched=True):
    ids = input_ids
    if prebatched:
        ids = jnp.squeeze(ids, axis=0)                       # [B, S]
    x = jnp.take(params["wte"], ids, axis=0).astype(jnp.float32)   # wte lookup glue -> [B,S,H]
    B, S, H = x.shape

    if last_indices is not None:
        li = jnp.asarray(last_indices)[0].astype(jnp.int32)  # reference: last_indices[0]
    else:
        li = jnp.full((B,), S - 2, dtype=jnp.int32)          # reference fallback: index = -2

    model_output, last_emb = encoder_forward(x, li, params, block_b=2)
    loss = infonce_loss(last_emb, jnp.asarray(matching_index).astype(jnp.int32))
    return loss, model_output


# ----------------------------------------------------------------------------
# Deterministic parameter construction (MXU weights stored in bf16).
# ----------------------------------------------------------------------------
def make_params(key, vocab, H, FF):
    ks = jax.random.split(key, 6)
    n = lambda k, shp: (0.02 * jax.random.normal(k, shp)).astype(jnp.float32)
    return {
        "wte":   n(ks[0], (vocab, H)),
        "ln1_g": jnp.ones((1, H), jnp.float32),
        "ln1_b": jnp.zeros((1, H), jnp.float32),
        "w_qkv": n(ks[1], (H, 3 * H)).astype(jnp.bfloat16),  # fused Q/K/V projection
        "w_o":   n(ks[2], (H, H)).astype(jnp.bfloat16),
        "ln2_g": jnp.ones((1, H), jnp.float32),
        "ln2_b": jnp.zeros((1, H), jnp.float32),
        "w1":    n(ks[3], (H, FF)).astype(jnp.bfloat16),
        "b1":    jnp.zeros((1, FF), jnp.float32),
        "w2":    n(ks[4], (FF, H)).astype(jnp.bfloat16),
        "b2":    jnp.zeros((1, H), jnp.float32),
    }


if __name__ == "__main__":
    key = jax.random.PRNGKey(0)
    # small but (8,128)-aligned shapes: S = 8 sublanes, H multiple of 128 lanes.
    VOCAB, B, S, H, FF = 64, 4, 8, 128, 256

    kp, ki, kl = jax.random.split(key, 3)
    params = make_params(kp, VOCAB, H, FF)

    input_ids = jax.random.randint(ki, (1, B, S), 0, VOCAB, dtype=jnp.int32)   # prebatched
    matching_index = jnp.array([2], dtype=jnp.int32)
    last_indices = jax.random.randint(kl, (1, B), S // 2, S, dtype=jnp.int32)  # per-row last token

    loss, model_output = retrieval_transformer_forward(
        input_ids, matching_index, last_indices, params, prebatched=True)
    jax.block_until_ready((loss, model_output))
    print("KERNEL_OK")
</pallas_src>

<mosaic_0001>
module attributes {stable_mosaic.version = 11 : i64} {
  func.func @encoder_block_kernel(%arg0: i32, %arg1: memref<4xi32, #tpu.memory_space<smem>>, %arg2: memref<2x8x128xf32, #tpu.memory_space<vmem>>, %arg3: memref<1x128xf32, #tpu.memory_space<vmem>>, %arg4: memref<1x128xf32, #tpu.memory_space<vmem>>, %arg5: memref<128x384xbf16, #tpu.memory_space<vmem>>, %arg6: memref<128x128xbf16, #tpu.memory_space<vmem>>, %arg7: memref<1x128xf32, #tpu.memory_space<vmem>>, %arg8: memref<1x128xf32, #tpu.memory_space<vmem>>, %arg9: memref<128x256xbf16, #tpu.memory_space<vmem>>, %arg10: memref<1x256xf32, #tpu.memory_space<vmem>>, %arg11: memref<256x128xbf16, #tpu.memory_space<vmem>>, %arg12: memref<1x128xf32, #tpu.memory_space<vmem>>, %arg13: memref<2x8x128xf32, #tpu.memory_space<vmem>>, %arg14: memref<1x2x128xf32, #tpu.memory_space<vmem>>) attributes {dimension_semantics = [#tpu.dimension_semantics<parallel>], iteration_bounds = array<i64: 2>, scalar_prefetch = 1 : i64, scratch_operands = 0 : i64, tpu.core_type = #tpu.core_type<tc>, window_params = [{transform_indices = @transform_0, window_bounds = array<i64: 2, 8, 128>}, {pipeline_mode = #tpu.pipeline_mode<synchronous>, transform_indices = @transform_1, window_bounds = array<i64: 1, 128>}, {pipeline_mode = #tpu.pipeline_mode<synchronous>, transform_indices = @transform_2, window_bounds = array<i64: 1, 128>}, {pipeline_mode = #tpu.pipeline_mode<synchronous>, transform_indices = @transform_3, window_bounds = array<i64: 128, 384>}, {pipeline_mode = #tpu.pipeline_mode<synchronous>, transform_indices = @transform_4, window_bounds = array<i64: 128, 128>}, {pipeline_mode = #tpu.pipeline_mode<synchronous>, transform_indices = @transform_5, window_bounds = array<i64: 1, 128>}, {pipeline_mode = #tpu.pipeline_mode<synchronous>, transform_indices = @transform_6, window_bounds = array<i64: 1, 128>}, {pipeline_mode = #tpu.pipeline_mode<synchronous>, transform_indices = @transform_7, window_bounds = array<i64: 128, 256>}, {pipeline_mode = #tpu.pipeline_mode<synchronous>, transform_indices = @transform_8, window_bounds = array<i64: 1, 256>}, {pipeline_mode = #tpu.pipeline_mode<synchronous>, transform_indices = @transform_9, window_bounds = array<i64: 256, 128>}, {pipeline_mode = #tpu.pipeline_mode<synchronous>, transform_indices = @transform_10, window_bounds = array<i64: 1, 128>}, {transform_indices = @transform_11, window_bounds = array<i64: 2, 8, 128>}, {transform_indices = @transform_12, window_bounds = array<i64: 1, 2, 128>}]} {
    %c0 = arith.constant 0 : index
    %c0_0 = arith.constant 0 : index
    %c0_1 = arith.constant 0 : index
    %0 = vector.load %arg2[%c0, %c0_0, %c0_1] : memref<2x8x128xf32, #tpu.memory_space<vmem>>, vector<2x8x128xf32>
    %1 = vector.shape_cast %0 : vector<2x8x128xf32> to vector<16x128xf32>
    %c0_2 = arith.constant 0 : index
    %c0_3 = arith.constant 0 : index
    %2 = vector.load %arg3[%c0_2, %c0_3] : memref<1x128xf32, #tpu.memory_space<vmem>>, vector<1x128xf32>
    %c0_4 = arith.constant 0 : index
    %c0_5 = arith.constant 0 : index
    %3 = vector.load %arg4[%c0_4, %c0_5] : memref<1x128xf32, #tpu.memory_space<vmem>>, vector<1x128xf32>
    %cst = arith.constant dense<0.000000e+00> : vector<16xf32>
    %4 = vector.multi_reduction <add>, %1, %cst [1] : vector<16x128xf32> to vector<16xf32>
    %5 = vector.shape_cast %4 : vector<16xf32> to vector<16x1xf32>
    %cst_6 = arith.constant 1.280000e+02 : f32
    %6 = vector.broadcast %cst_6 : f32 to vector<16x1xf32>
    %7 = arith.divf %5, %6 : vector<16x1xf32>
    %8 = vector.broadcast %7 : vector<16x1xf32> to vector<16x128xf32>
    %9 = arith.subf %1, %8 : vector<16x128xf32>
    %10 = arith.mulf %9, %9 : vector<16x128xf32>
    %cst_7 = arith.constant dense<0.000000e+00> : vector<16xf32>
    %11 = vector.multi_reduction <add>, %10, %cst_7 [1] : vector<16x128xf32> to vector<16xf32>
    %12 = vector.shape_cast %11 : vector<16xf32> to vector<16x1xf32>
    %cst_8 = arith.constant 1.280000e+02 : f32
    %13 = vector.broadcast %cst_8 : f32 to vector<16x1xf32>
    %14 = arith.divf %12, %13 : vector<16x1xf32>
    %15 = vector.broadcast %7 : vector<16x1xf32> to vector<16x128xf32>
    %16 = arith.subf %1, %15 : vector<16x128xf32>
    %cst_9 = arith.constant 9.99999974E-6 : f32
    %17 = vector.broadcast %cst_9 : f32 to vector<16x1xf32>
    %18 = arith.addf %14, %17 : vector<16x1xf32>
    %19 = math.rsqrt %18 : vector<16x1xf32>
    %20 = vector.broadcast %19 : vector<16x1xf32> to vector<16x128xf32>
    %21 = arith.mulf %16, %20 : vector<16x128xf32>
    %22 = vector.broadcast %2 : vector<1x128xf32> to vector<16x128xf32>
    %23 = arith.mulf %21, %22 : vector<16x128xf32>
    %24 = vector.broadcast %3 : vector<1x128xf32> to vector<16x128xf32>
    %25 = arith.addf %23, %24 : vector<16x128xf32>
    %26 = arith.truncf %25 : vector<16x128xf32> to vector<16x128xbf16>
    %c0_10 = arith.constant 0 : index
    %c0_11 = arith.constant 0 : index
    %27 = vector.load %arg5[%c0_10, %c0_11] : memref<128x384xbf16, #tpu.memory_space<vmem>>, vector<128x384xbf16>
    %cst_12 = arith.constant dense<0.000000e+00> : vector<16x384xf32>
    %28 = tpu.matmul %26, %27, %cst_12 {dimension_numbers = #tpu.dot_dimension_numbers<[1], [0], [0], [1], [0, 0, 1, 1], [], []>} : vector<16x128xbf16>, vector<128x384xbf16>, vector<16x384xf32> -> vector<16x384xf32>
    %29 = vector.extract_strided_slice %28 {offsets = [0, 0], sizes = [16, 128], strides = [1, 1]} : vector<16x384xf32> to vector<16x128xf32>
    %30 = arith.truncf %29 : vector<16x128xf32> to vector<16x128xbf16>
    %31 = vector.shape_cast %30 : vector<16x128xbf16> to vector<2x8x128xbf16>
    %32 = vector.extract_strided_slice %28 {offsets = [0, 128], sizes = [16, 128], strides = [1, 1]} : vector<16x384xf32> to vector<16x128xf32>
    %33 = arith.truncf %32 : vector<16x128xf32> to vector<16x128xbf16>
    %34 = vector.shape_cast %33 : vector<16x128xbf16> to vector<2x8x128xbf16>
    %35 = vector.extract_strided_slice %28 {offsets = [0, 256], sizes = [16, 128], strides = [1, 1]} : vector<16x384xf32> to vector<16x128xf32>
    %36 = arith.truncf %35 : vector<16x128xf32> to vector<16x128xbf16>
    %37 = vector.shape_cast %36 : vector<16x128xbf16> to vector<2x8x128xbf16>
    "tpu.trace_start"() <{level = 10 : i32, message = "bqd,bkd->bqk"}> : () -> ()
    %cst_13 = arith.constant dense<0.000000e+00> : vector<2x8x8xf32>
    %38 = tpu.matmul %31, %34, %cst_13 {dimension_numbers = #tpu.dot_dimension_numbers<[2], [2], [1], [1], [0, 0, 0, 1, 1, 1], [0], [0]>} : vector<2x8x128xbf16>, vector<2x8x128xbf16>, vector<2x8x8xf32> -> vector<2x8x8xf32>
    %cst_14 = arith.constant 1.280000e+02 : f32
    "tpu.trace_stop"() : () -> ()
    %39 = math.sqrt %cst_14 : f32
    %cst_15 = arith.constant 1.000000e+00 : f32
    %40 = arith.divf %cst_15, %39 : f32
    %41 = vector.broadcast %40 : f32 to vector<2x8x8xf32>
    %42 = arith.mulf %38, %41 : vector<2x8x8xf32>
    %cst_16 = arith.constant dense<0xFF800000> : vector<2x8xf32>
    %43 = vector.multi_reduction <maximumf>, %42, %cst_16 [2] : vector<2x8x8xf32> to vector<2x8xf32>
    %44 = vector.shape_cast %43 : vector<2x8xf32> to vector<2x8x1xf32>
    %45 = vector.broadcast %44 : vector<2x8x1xf32> to vector<2x8x8xf32>
    %46 = arith.subf %42, %45 : vector<2x8x8xf32>
    %47 = math.exp %46 : vector<2x8x8xf32>
    %cst_17 = arith.constant dense<0.000000e+00> : vector<2x8xf32>
    %48 = vector.multi_reduction <add>, %47, %cst_17 [2] : vector<2x8x8xf32> to vector<2x8xf32>
    %49 = vector.shape_cast %48 : vector<2x8xf32> to vector<2x8x1xf32>
    %50 = tpu.reciprocal %49 {approx = true} : vector<2x8x1xf32> -> vector<2x8x1xf32>
    %51 = vector.broadcast %50 : vector<2x8x1xf32> to vector<2x8x8xf32>
    %52 = arith.mulf %47, %51 : vector<2x8x8xf32>
    %53 = arith.truncf %52 : vector<2x8x8xf32> to vector<2x8x8xbf16>
    "tpu.trace_start"() <{level = 10 : i32, message = "bqk,bkd->bqd"}> : () -> ()
    %cst_18 = arith.constant dense<0.000000e+00> : vector<2x8x128xf32>
    %54 = tpu.matmul %53, %37, %cst_18 {dimension_numbers = #tpu.dot_dimension_numbers<[2], [1], [1], [2], [0, 0, 0, 1, 1, 2], [0], [0]>} : vector<2x8x8xbf16>, vector<2x8x128xbf16>, vector<2x8x128xf32> -> vector<2x8x128xf32>
    "tpu.trace_stop"() : () -> ()
    %55 = vector.shape_cast %54 : vector<2x8x128xf32> to vector<16x128xf32>
    %56 = arith.truncf %55 : vector<16x128xf32> to vector<16x128xbf16>
    %c0_19 = arith.constant 0 : index
    %c0_20 = arith.constant 0 : index
    %57 = vector.load %arg6[%c0_19, %c0_20] : memref<128x128xbf16, #tpu.memory_space<vmem>>, vector<128x128xbf16>
    %cst_21 = arith.constant dense<0.000000e+00> : vector<16x128xf32>
    %58 = tpu.matmul %56, %57, %cst_21 {dimension_numbers = #tpu.dot_dimension_numbers<[1], [0], [0], [1], [0, 0, 1, 1], [], []>} : vector<16x128xbf16>, vector<128x128xbf16>, vector<16x128xf32> -> vector<16x128xf32>
    %59 = arith.addf %1, %58 : vector<16x128xf32>
    %c0_22 = arith.constant 0 : index
    %c0_23 = arith.constant 0 : index
    %60 = vector.load %arg7[%c0_22, %c0_23] : memref<1x128xf32, #tpu.memory_space<vmem>>, vector<1x128xf32>
    %c0_24 = arith.constant 0 : index
    %c0_25 = arith.constant 0 : index
    %61 = vector.load %arg8[%c0_24, %c0_25] : memref<1x128xf32, #tpu.memory_space<vmem>>, vector<1x128xf32>
    %cst_26 = arith.constant dense<0.000000e+00> : vector<16xf32>
    %62 = vector.multi_reduction <add>, %59, %cst_26 [1] : vector<16x128xf32> to vector<16xf32>
    %63 = vector.shape_cast %62 : vector<16xf32> to vector<16x1xf32>
    %cst_27 = arith.constant 1.280000e+02 : f32
    %64 = vector.broadcast %cst_27 : f32 to vector<16x1xf32>
    %65 = arith.divf %63, %64 : vector<16x1xf32>
    %66 = vector.broadcast %65 : vector<16x1xf32> to vector<16x128xf32>
    %67 = arith.subf %59, %66 : vector<16x128xf32>
    %68 = arith.mulf %67, %67 : vector<16x128xf32>
    %cst_28 = arith.constant dense<0.000000e+00> : vector<16xf32>
    %69 = vector.multi_reduction <add>, %68, %cst_28 [1] : vector<16x128xf32> to vector<16xf32>
    %70 = vector.shape_cast %69 : vector<16xf32> to vector<16x1xf32>
    %cst_29 = arith.constant 1.280000e+02 : f32
    %71 = vector.broadcast %cst_29 : f32 to vector<16x1xf32>
    %72 = arith.divf %70, %71 : vector<16x1xf32>
    %73 = vector.broadcast %65 : vector<16x1xf32> to vector<16x128xf32>
    %74 = arith.subf %59, %73 : vector<16x128xf32>
    %cst_30 = arith.constant 9.99999974E-6 : f32
    %75 = vector.broadcast %cst_30 : f32 to vector<16x1xf32>
    %76 = arith.addf %72, %75 : vector<16x1xf32>
    %77 = math.rsqrt %76 : vector<16x1xf32>
    %78 = vector.broadcast %77 : vector<16x1xf32> to vector<16x128xf32>
    %79 = arith.mulf %74, %78 : vector<16x128xf32>
    %80 = vector.broadcast %60 : vector<1x128xf32> to vector<16x128xf32>
    %81 = arith.mulf %79, %80 : vector<16x128xf32>
    %82 = vector.broadcast %61 : vector<1x128xf32> to vector<16x128xf32>
    %83 = arith.addf %81, %82 : vector<16x128xf32>
    %84 = arith.truncf %83 : vector<16x128xf32> to vector<16x128xbf16>
    %c0_31 = arith.constant 0 : index
    %c0_32 = arith.constant 0 : index
    %85 = vector.load %arg9[%c0_31, %c0_32] : memref<128x256xbf16, #tpu.memory_space<vmem>>, vector<128x256xbf16>
    %cst_33 = arith.constant dense<0.000000e+00> : vector<16x256xf32>
    %86 = tpu.matmul %84, %85, %cst_33 {dimension_numbers = #tpu.dot_dimension_numbers<[1], [0], [0], [1], [0, 0, 1, 1], [], []>} : vector<16x128xbf16>, vector<128x256xbf16>, vector<16x256xf32> -> vector<16x256xf32>
    %c0_34 = arith.constant 0 : index
    %c0_35 = arith.constant 0 : index
    %87 = vector.load %arg10[%c0_34, %c0_35] : memref<1x256xf32, #tpu.memory_space<vmem>>, vector<1x256xf32>
    %88 = vector.broadcast %87 : vector<1x256xf32> to vector<16x256xf32>
    %89 = arith.addf %86, %88 : vector<16x256xf32>
    %90 = arith.mulf %89, %89 : vector<16x256xf32>
    %91 = arith.mulf %89, %90 : vector<16x256xf32>
    %cst_36 = arith.constant 4.471500e-02 : f32
    %92 = vector.broadcast %cst_36 : f32 to vector<16x256xf32>
    %93 = arith.mulf %92, %91 : vector<16x256xf32>
    %94 = arith.addf %89, %93 : vector<16x256xf32>
    %cst_37 = arith.constant 0.797884583 : f32
    %95 = vector.broadcast %cst_37 : f32 to vector<16x256xf32>
    %96 = arith.mulf %95, %94 : vector<16x256xf32>
    %97 = math.tanh %96 : vector<16x256xf32>
    %cst_38 = arith.constant 1.000000e+00 : f32
    %98 = vector.broadcast %cst_38 : f32 to vector<16x256xf32>
    %99 = arith.addf %98, %97 : vector<16x256xf32>
    %cst_39 = arith.constant 5.000000e-01 : f32
    %100 = vector.broadcast %cst_39 : f32 to vector<16x256xf32>
    %101 = arith.mulf %100, %99 : vector<16x256xf32>
    %102 = arith.mulf %89, %101 : vector<16x256xf32>
    %103 = arith.truncf %102 : vector<16x256xf32> to vector<16x256xbf16>
    %c0_40 = arith.constant 0 : index
    %c0_41 = arith.constant 0 : index
    %104 = vector.load %arg11[%c0_40, %c0_41] : memref<256x128xbf16, #tpu.memory_space<vmem>>, vector<256x128xbf16>
    %cst_42 = arith.constant dense<0.000000e+00> : vector<16x128xf32>
    %105 = tpu.matmul %103, %104, %cst_42 {dimension_numbers = #tpu.dot_dimension_numbers<[1], [0], [0], [1], [0, 0, 1, 1], [], []>} : vector<16x256xbf16>, vector<256x128xbf16>, vector<16x128xf32> -> vector<16x128xf32>
    %106 = arith.addf %59, %105 : vector<16x128xf32>
    %c0_43 = arith.constant 0 : index
    %c0_44 = arith.constant 0 : index
    %107 = vector.load %arg12[%c0_43, %c0_44] : memref<1x128xf32, #tpu.memory_space<vmem>>, vector<1x128xf32>
    %108 = vector.broadcast %107 : vector<1x128xf32> to vector<16x128xf32>
    %109 = arith.addf %106, %108 : vector<16x128xf32>
    %110 = vector.shape_cast %109 : vector<16x128xf32> to vector<2x8x128xf32>
    %c0_45 = arith.constant 0 : index
    %c0_46 = arith.constant 0 : index
    %c0_47 = arith.constant 0 : index
    %111 = vector.load %arg13[%c0_45, %c0_46, %c0_47] : memref<2x8x128xf32, #tpu.memory_space<vmem>>, vector<2x8x128xf32>
    tpu.vector_store %arg13[%c0_45, %c0_46, %c0_47], %110 {strides = array<i32>} : memref<2x8x128xf32, #tpu.memory_space<vmem>>, vector<2x8x128xf32>,
    %c2_i32 = arith.constant 2 : i32
    %112 = arith.muli %arg0, %c2_i32 : i32
    %c0_i32 = arith.constant 0 : i32
    %113 = arith.addi %112, %c0_i32 : i32
    %114 = arith.index_cast %113 : i32 to index
    %115 = memref.load %arg1[%114] : memref<4xi32, #tpu.memory_space<smem>>
    %c0_48 = arith.constant 0 : index
    %116 = arith.index_cast %115 : i32 to index
    %c0_49 = arith.constant 0 : index
    %117 = vector.load %arg13[%c0_48, %116, %c0_49] : memref<2x8x128xf32, #tpu.memory_space<vmem>>, vector<1x1x128xf32>
    %118 = vector.shape_cast %117 : vector<1x1x128xf32> to vector<1x128xf32>
    %c0_50 = arith.constant 0 : index
    %c0_51 = arith.constant 0 : index
    %c0_52 = arith.constant 0 : index
    %119 = vector.load %arg14[%c0_50, %c0_51, %c0_52] : memref<1x2x128xf32, #tpu.memory_space<vmem>>, vector<1x1x128xf32>
    %120 = vector.shape_cast %119 : vector<1x1x128xf32> to vector<1x128xf32>
    %121 = vector.shape_cast %118 : vector<1x128xf32> to vector<1x1x128xf32>
    tpu.vector_store %arg14[%c0_50, %c0_51, %c0_52], %121 {strides = array<i32>} : memref<1x2x128xf32, #tpu.memory_space<vmem>>, vector<1x1x128xf32>,
    %c1_i32 = arith.constant 1 : i32
    %122 = arith.addi %112, %c1_i32 : i32
    %123 = arith.index_cast %122 : i32 to index
    %124 = memref.load %arg1[%123] : memref<4xi32, #tpu.memory_space<smem>>
    %c1 = arith.constant 1 : index
    %125 = arith.index_cast %124 : i32 to index
    %c0_53 = arith.constant 0 : index
    %126 = vector.load %arg13[%c1, %125, %c0_53] : memref<2x8x128xf32, #tpu.memory_space<vmem>>, vector<1x1x128xf32>
    %127 = vector.shape_cast %126 : vector<1x1x128xf32> to vector<1x128xf32>
    %c0_54 = arith.constant 0 : index
    %c1_55 = arith.constant 1 : index
    %c0_56 = arith.constant 0 : index
    %128 = vector.load %arg14[%c0_54, %c1_55, %c0_56] : memref<1x2x128xf32, #tpu.memory_space<vmem>>, vector<1x1x128xf32>
    %129 = vector.shape_cast %128 : vector<1x1x128xf32> to vector<1x128xf32>
    %130 = vector.shape_cast %127 : vector<1x128xf32> to vector<1x1x128xf32>
    tpu.vector_store %arg14[%c0_54, %c1_55, %c0_56], %130 {strides = array<i32>} : memref<1x2x128xf32, #tpu.memory_space<vmem>>, vector<1x1x128xf32>,
    return
  }
  func.func @transform_0(%arg0: i32, %arg1: memref<4xi32, #tpu.memory_space<smem>>) -> (i32, i32, i32) {
    %c0_i32 = arith.constant 0 : i32
    %c0_i32_0 = arith.constant 0 : i32
    %c0_i32_1 = arith.constant 0 : i32
    return %arg0, %c0_i32, %c0_i32_0 : i32, i32, i32
  }
  func.func @transform_1(%arg0: i32, %arg1: memref<4xi32, #tpu.memory_space<smem>>) -> (i32, i32) {
    %c0_i32 = arith.constant 0 : i32
    %c0_i32_0 = arith.constant 0 : i32
    %c0_i32_1 = arith.constant 0 : i32
    return %c0_i32, %c0_i32_0 : i32, i32
  }
  func.func @transform_2(%arg0: i32, %arg1: memref<4xi32, #tpu.memory_space<smem>>) -> (i32, i32) {
    %c0_i32 = arith.constant 0 : i32
    %c0_i32_0 = arith.constant 0 : i32
    %c0_i32_1 = arith.constant 0 : i32
    return %c0_i32, %c0_i32_0 : i32, i32
  }
  func.func @transform_3(%arg0: i32, %arg1: memref<4xi32, #tpu.memory_space<smem>>) -> (i32, i32) {
    %c0_i32 = arith.constant 0 : i32
    %c0_i32_0 = arith.constant 0 : i32
    %c0_i32_1 = arith.constant 0 : i32
    return %c0_i32, %c0_i32_0 : i32, i32
  }
  func.func @transform_4(%arg0: i32, %arg1: memref<4xi32, #tpu.memory_space<smem>>) -> (i32, i32) {
    %c0_i32 = arith.constant 0 : i32
    %c0_i32_0 = arith.constant 0 : i32
    %c0_i32_1 = arith.constant 0 : i32
    return %c0_i32, %c0_i32_0 : i32, i32
  }
  func.func @transform_5(%arg0: i32, %arg1: memref<4xi32, #tpu.memory_space<smem>>) -> (i32, i32) {
    %c0_i32 = arith.constant 0 : i32
    %c0_i32_0 = arith.constant 0 : i32
    %c0_i32_1 = arith.constant 0 : i32
    return %c0_i32, %c0_i32_0 : i32, i32
  }
  func.func @transform_6(%arg0: i32, %arg1: memref<4xi32, #tpu.memory_space<smem>>) -> (i32, i32) {
    %c0_i32 = arith.constant 0 : i32
    %c0_i32_0 = arith.constant 0 : i32
    %c0_i32_1 = arith.constant 0 : i32
    return %c0_i32, %c0_i32_0 : i32, i32
  }
  func.func @transform_7(%arg0: i32, %arg1: memref<4xi32, #tpu.memory_space<smem>>) -> (i32, i32) {
    %c0_i32 = arith.constant 0 : i32
    %c0_i32_0 = arith.constant 0 : i32
    %c0_i32_1 = arith.constant 0 : i32
    return %c0_i32, %c0_i32_0 : i32, i32
  }
  func.func @transform_8(%arg0: i32, %arg1: memref<4xi32, #tpu.memory_space<smem>>) -> (i32, i32) {
    %c0_i32 = arith.constant 0 : i32
    %c0_i32_0 = arith.constant 0 : i32
    %c0_i32_1 = arith.constant 0 : i32
    return %c0_i32, %c0_i32_0 : i32, i32
  }
  func.func @transform_9(%arg0: i32, %arg1: memref<4xi32, #tpu.memory_space<smem>>) -> (i32, i32) {
    %c0_i32 = arith.constant 0 : i32
    %c0_i32_0 = arith.constant 0 : i32
    %c0_i32_1 = arith.constant 0 : i32
    return %c0_i32, %c0_i32_0 : i32, i32
  }
  func.func @transform_10(%arg0: i32, %arg1: memref<4xi32, #tpu.memory_space<smem>>) -> (i32, i32) {
    %c0_i32 = arith.constant 0 : i32
    %c0_i32_0 = arith.constant 0 : i32
    %c0_i32_1 = arith.constant 0 : i32
    return %c0_i32, %c0_i32_0 : i32, i32
  }
  func.func @transform_11(%arg0: i32, %arg1: memref<4xi32, #tpu.memory_space<smem>>) -> (i32, i32, i32) {
    %c0_i32 = arith.constant 0 : i32
    %c0_i32_0 = arith.constant 0 : i32
    %c0_i32_1 = arith.constant 0 : i32
    return %arg0, %c0_i32, %c0_i32_0 : i32, i32, i32
  }
  func.func @transform_12(%arg0: i32, %arg1: memref<4xi32, #tpu.memory_space<smem>>) -> (i32, i32, i32) {
    %c0_i32 = arith.constant 0 : i32
    %c0_i32_0 = arith.constant 0 : i32
    %c0_i32_1 = arith.constant 0 : i32
    return %arg0, %c0_i32, %c0_i32_0 : i32, i32, i32
  }
}

</mosaic_0001>

<llo_original>
// kernel: tpu_custom_call.1
$region0: #{tpu_custom_call.1}
  #allocation0 [shape = 'u32[]', space=smem, size = 0x4, offset = 0x4, fixed_abs, tag = 'smem constant byte address 0x4 - core index']
  #allocation1 [shape = 'u32[144,128]{1,0:T(1,128)}', space=vmem, size = 0x12000, scoped, tag = 'internal scratch']
  #allocation2 [shape = 's32[1]{0}', space=sflag, size = 0x4, scoped, tag = 'scoped memory for tpu_custom_call.1']
  #allocation3 [shape = 'u8[512]{0}', space=smem, size = 0x200, scoped, tag = 'prefetched SMEM operand 0']
  %s0 = inlined_call_operand.hbm [shape: s32[4], index: 0, kind: input, shape index: {}]
  %s1 = inlined_call_operand.hbm [shape: f32[4,8,128], index: 1, kind: input, shape index: {}]
  %s2 = inlined_call_operand.vmem [shape: f32[1,128], index: 2, kind: input, shape index: {}]
  %s3 = inlined_call_operand.vmem [shape: f32[1,128], index: 3, kind: input, shape index: {}]
  %s4 = inlined_call_operand.hbm [shape: bf16[128,384], index: 4, kind: input, shape index: {}]
  %s5 = inlined_call_operand.hbm [shape: bf16[128,128], index: 5, kind: input, shape index: {}]
  %s6 = inlined_call_operand.vmem [shape: f32[1,128], index: 6, kind: input, shape index: {}]
  %s7 = inlined_call_operand.vmem [shape: f32[1,128], index: 7, kind: input, shape index: {}]
  %s8 = inlined_call_operand.hbm [shape: bf16[128,256], index: 8, kind: input, shape index: {}]
  %s9 = inlined_call_operand.vmem [shape: f32[1,256], index: 9, kind: input, shape index: {}]
  %s10 = inlined_call_operand.hbm [shape: bf16[256,128], index: 10, kind: input, shape index: {}]
  %s11 = inlined_call_operand.vmem [shape: f32[1,128], index: 11, kind: input, shape index: {}]
  %s12 = inlined_call_operand.hbm [shape: f32[4,8,128], index: 12, kind: output, shape index: {0}]
  %s13 = inlined_call_operand.hbm [shape: f32[2,2,128], index: 13, kind: output, shape index: {1}]
  %14 = xla_tuple %s12, %s13
  %s15 = sld [smem:[#allocation0]]
  $region105: #{tpu_custom_call.1} parent=0
    _
  %s17 = ssub.s32 1, %s15
  %s18 = scalar_select 0, %s17, %s15
  %20 = dma.hbm_to_smem %s0, 16, [#allocation3], [#allocation2]
  %21 = dma.done [#allocation2], 16
  %22 = sfence
  $region1: #{tpu_custom_call.1} parent=0
    #allocation4 [shape = 'u8[16384]{0}', space=vmem, size = 0x4000, scoped, tag = 'input window, operand 1']
    #allocation5 [shape = 's32[2]{0}', space=sflag, size = 0x8, scoped, tag = 'scoped memory for tpu_custom_call.1']
    #allocation6 [shape = 's32[2]{0}', space=sflag, size = 0x8, scoped, tag = 'scoped memory for tpu_custom_call.1']
    #allocation7 [shape = 'u8[98304]{0}', space=vmem, size = 0x18000, scoped, tag = 'input window, operand 4, single buffered']
    #allocation8 [shape = 's32[1]{0}', space=sflag, size = 0x4, scoped, tag = 'scoped memory for tpu_custom_call.1']
    #allocation9 [shape = 'u8[32768]{0}', space=vmem, size = 0x8000, scoped, tag = 'input window, operand 5, single buffered']
    #allocation10 [shape = 'u8[65536]{0}', space=vmem, size = 0x10000, scoped, tag = 'input window, operand 8, single buffered']
    #allocation11 [shape = 's32[1]{0}', space=sflag, size = 0x4, scoped, tag = 'scoped memory for tpu_custom_call.1']
    #allocation12 [shape = 'u8[65536]{0}', space=vmem, size = 0x10000, scoped, tag = 'input window, operand 10, single buffered']
    #allocation13 [shape = 'u8[16384]{0}', space=vmem, size = 0x4000, scoped, tag = 'output window, operand 0']
    #allocation14 [shape = 'u8[2048]{0}', space=vmem, size = 0x800, scoped, tag = 'output window, operand 1']
    #allocation15 [shape = 's32[2]{0}', space=sflag, size = 0x8, scoped, tag = 'scoped memory for tpu_custom_call.1']
    %23 = vsyncpa [#allocation5], 0
    %s24 = scalar_lea.sflag [#allocation5], 1
    %25 = vsyncpa %s24, 0
    %26 = vsyncpa [#allocation8], 0
    %27 = vsyncpa [#allocation11], 0
    %28 = vsyncpa [#allocation6], 0
    %s29 = scalar_lea.sflag [#allocation6], 1
    %30 = vsyncpa %s29, 0
    %31 = vsyncpa [#allocation15], 0
    %s32 = scalar_lea.sflag [#allocation15], 1
    %33 = vsyncpa %s32, 0
    loop: start=0, step=1, limit=4
    $region2: #{tpu_custom_call.1} parent=1 // loop_pre_header
      _
    $region3: #{tpu_custom_call.1} parent=1 // loop_header
      %s35 = sphi 0, %s39
      %p36 = scmp.ge.s32.totalorder %s35, 4
      %s45 = sphi 0, %s47
      %s48 = sphi 0, %s45
      %s49 = sphi 0, %s48
      %s65 = sphi 0, %s49
      %s69 = sphi 0, %s69
      %s71 = sphi 0, %s69
      %s72 = sphi 0, %s71
      %s86 = sphi 0, %s72
      %s90 = sphi 0, %s90
      %s92 = sphi 0, %s90
      %s93 = sphi 0, %s92
      %s107 = sphi 0, %s93
      %s111 = sphi 0, %s111
      %s113 = sphi 0, %s111
      %s114 = sphi 0, %s113
      %s128 = sphi 0, %s114
      %s132 = sphi 0, %s132
      %s134 = sphi 0, %s132
      %s135 = sphi 0, %s134
      %s149 = sphi 0, %s135
      %s153 = sphi 0, %s153
      %s155 = sphi 0, %s153
      %s156 = sphi 0, %s155
      %s170 = sphi 0, %s156
      %s174 = sphi 0, %s174
      %s176 = sphi 0, %s174
      %s177 = sphi 0, %s176
      %s191 = sphi 0, %s177
      %s195 = sphi 0, %s195
      %s197 = sphi 0, %s195
      %s198 = sphi 0, %s197
      %s212 = sphi 0, %s198
      %s216 = sphi 0, %s216
      %s218 = sphi 0, %s216
      %s219 = sphi 0, %s218
      %s233 = sphi 0, %s219
      %s237 = sphi 0, %s237
      %s239 = sphi 0, %s237
      %s240 = sphi 0, %s239
      %s254 = sphi 0, %s240
      %s258 = sphi 0, %s258
      %s260 = sphi 0, %s258
      %s261 = sphi 0, %s260
      %s275 = sphi 0, %s261
      %s281 = sphi 0, %s283
      %s284 = sphi 0, %s281
      %s285 = sphi 0, %s284
      %s301 = sphi 0, %s285
      %s307 = sphi 0, %s309
      %s310 = sphi 0, %s307
      %s311 = sphi 0, %s310
      %s327 = sphi 0, %s311
    $region4: #{tpu_custom_call.1} parent=1 // loop_header_branch
      %38 = sbr.rel (%p36) target = $region8
    $region5: #{tpu_custom_call.1} parent=1 // loop_body
      %s40 = ssub.s32 %s35, 1
      %s41 = ssub.s32 %s35, 2
      %s42 = sadd.s32 %s35, 1
      %s43 = ssub.s32 %s35, %s42
      %p44 = scmp.eq.s32.totalorder %s43, 0
      %s46 = sadd.s32 %s45, 1
      %s47 = scalar_select %p44, %s45, %s46
      %p50 = pneg %p44
      %p51 = scmp.eq.s32.totalorder %s35, 1
      %p52 = por %p50, %p51
      %p53 = scmp.ne.s32.totalorder %s45, %s48
      %p54 = scmp.eq.s32.totalorder %s35, 0
      %p55 = por %p53, %p54
      %p56 = scmp.ne.s32.totalorder %s45, %s48
      %p57 = scmp.eq.s32.totalorder %s40, 1
      %p58 = por %p56, %p57
      %p59 = scmp.ne.s32.totalorder %s48, %s49
      %p60 = scmp.eq.s32.totalorder %s40, 0
      %p61 = por %p59, %p60
      %p62 = scmp.ne.s32.totalorder %s48, %s49
      %p63 = scmp.eq.s32.totalorder %s41, 1
      %p64 = por %p62, %p63
      %p66 = scmp.ne.s32.totalorder %s49, %s65
      %p67 = scmp.eq.s32.totalorder %s41, 0
      %p68 = por %p66, %p67
      %s70 = sadd.s32 %s69, 1
      %p73 = scmp.eq.s32.totalorder %s35, 1
      %p74 = scmp.ne.s32.totalorder %s69, %s71
      %p75 = scmp.eq.s32.totalorder %s35, 0
      %p76 = por %p74, %p75
      %p77 = scmp.ne.s32.totalorder %s69, %s71
      %p78 = scmp.eq.s32.totalorder %s40, 1
      %p79 = por %p77, %p78
      %p80 = scmp.ne.s32.totalorder %s71, %s72
      %p81 = scmp.eq.s32.totalorder %s40, 0
      %p82 = por %p80, %p81
      %p83 = scmp.ne.s32.totalorder %s71, %s72
      %p84 = scmp.eq.s32.totalorder %s41, 1
      %p85 = por %p83, %p84
      %p87 = scmp.ne.s32.totalorder %s72, %s86
      %p88 = scmp.eq.s32.totalorder %s41, 0
      %p89 = por %p87, %p88
      %s91 = sadd.s32 %s90, 1
      %p94 = scmp.eq.s32.totalorder %s35, 1
      %p95 = scmp.ne.s32.totalorder %s90, %s92
      %p96 = scmp.eq.s32.totalorder %s35, 0
      %p97 = por %p95, %p96
      %p98 = scmp.ne.s32.totalorder %s90, %s92
      %p99 = scmp.eq.s32.totalorder %s40, 1
      %p100 = por %p98, %p99
      %p101 = scmp.ne.s32.totalorder %s92, %s93
      %p102 = scmp.eq.s32.totalorder %s40, 0
      %p103 = por %p101, %p102
      %p104 = scmp.ne.s32.totalorder %s92, %s93
      %p105 = scmp.eq.s32.totalorder %s41, 1
      %p106 = por %p104, %p105
      %p108 = scmp.ne.s32.totalorder %s93, %s107
      %p109 = scmp.eq.s32.totalorder %s41, 0
      %p110 = por %p108, %p109
      %s112 = sadd.s32 %s111, 1
      %p115 = scmp.eq.s32.totalorder %s35, 1
      %p116 = scmp.ne.s32.totalorder %s111, %s113
      %p117 = scmp.eq.s32.totalorder %s35, 0
      %p118 = por %p116, %p117
      %p119 = scmp.ne.s32.totalorder %s111, %s113
      %p120 = scmp.eq.s32.totalorder %s40, 1
      %p121 = por %p119, %p120
      %p122 = scmp.ne.s32.totalorder %s113, %s114
      %p123 = scmp.eq.s32.totalorder %s40, 0
      %p124 = por %p122, %p123
      %p125 = scmp.ne.s32.totalorder %s113, %s114
      %p126 = scmp.eq.s32.totalorder %s41, 1
      %p127 = por %p125, %p126
      %p129 = scmp.ne.s32.totalorder %s114, %s128
      %p130 = scmp.eq.s32.totalorder %s41, 0
      %p131 = por %p129, %p130
      %s133 = sadd.s32 %s132, 1
      %p136 = scmp.eq.s32.totalorder %s35, 1
      %p137 = scmp.ne.s32.totalorder %s132, %s134
      %p138 = scmp.eq.s32.totalorder %s35, 0
      %p139 = por %p137, %p138
      %p140 = scmp.ne.s32.totalorder %s132, %s134
      %p141 = scmp.eq.s32.totalorder %s40, 1
      %p142 = por %p140, %p141
      %p143 = scmp.ne.s32.totalorder %s134, %s135
      %p144 = scmp.eq.s32.totalorder %s40, 0
      %p145 = por %p143, %p144
      %p146 = scmp.ne.s32.totalorder %s134, %s135
      %p147 = scmp.eq.s32.totalorder %s41, 1
      %p148 = por %p146, %p147
      %p150 = scmp.ne.s32.totalorder %s135, %s149
      %p151 = scmp.eq.s32.totalorder %s41, 0
      %p152 = por %p150, %p151
      %s154 = sadd.s32 %s153, 1
      %p157 = scmp.eq.s32.totalorder %s35, 1
      %p158 = scmp.ne.s32.totalorder %s153, %s155
      %p159 = scmp.eq.s32.totalorder %s35, 0
      %p160 = por %p158, %p159
      %p161 = scmp.ne.s32.totalorder %s153, %s155
      %p162 = scmp.eq.s32.totalorder %s40, 1
      %p163 = por %p161, %p162
      %p164 = scmp.ne.s32.totalorder %s155, %s156
      %p165 = scmp.eq.s32.totalorder %s40, 0
      %p166 = por %p164, %p165
      %p167 = scmp.ne.s32.totalorder %s155, %s156
      %p168 = scmp.eq.s32.totalorder %s41, 1
      %p169 = por %p167, %p168
      %p171 = scmp.ne.s32.totalorder %s156, %s170
      %p172 = scmp.eq.s32.totalorder %s41, 0
      %p173 = por %p171, %p172
      %s175 = sadd.s32 %s174, 1
      %p178 = scmp.eq.s32.totalorder %s35, 1
      %p179 = scmp.ne.s32.totalorder %s174, %s176
      %p180 = scmp.eq.s32.totalorder %s35, 0
      %p181 = por %p179, %p180
      %p182 = scmp.ne.s32.totalorder %s174, %s176
      %p183 = scmp.eq.s32.totalorder %s40, 1
      %p184 = por %p182, %p183
      %p185 = scmp.ne.s32.totalorder %s176, %s177
      %p186 = scmp.eq.s32.totalorder %s40, 0
      %p187 = por %p185, %p186
      %p188 = scmp.ne.s32.totalorder %s176, %s177
      %p189 = scmp.eq.s32.totalorder %s41, 1
      %p190 = por %p188, %p189
      %p192 = scmp.ne.s32.totalorder %s177, %s191
      %p193 = scmp.eq.s32.totalorder %s41, 0
      %p194 = por %p192, %p193
      %s196 = sadd.s32 %s195, 1
      %p199 = scmp.eq.s32.totalorder %s35, 1
      %p200 = scmp.ne.s32.totalorder %s195, %s197
      %p201 = scmp.eq.s32.totalorder %s35, 0
      %p202 = por %p200, %p201
      %p203 = scmp.ne.s32.totalorder %s195, %s197
      %p204 = scmp.eq.s32.totalorder %s40, 1
      %p205 = por %p203, %p204
      %p206 = scmp.ne.s32.totalorder %s197, %s198
      %p207 = scmp.eq.s32.totalorder %s40, 0
      %p208 = por %p206, %p207
      %p209 = scmp.ne.s32.totalorder %s197, %s198
      %p210 = scmp.eq.s32.totalorder %s41, 1
      %p211 = por %p209, %p210
      %p213 = scmp.ne.s32.totalorder %s198, %s212
      %p214 = scmp.eq.s32.totalorder %s41, 0
      %p215 = por %p213, %p214
      %s217 = sadd.s32 %s216, 1
      %p220 = scmp.eq.s32.totalorder %s35, 1
      %p221 = scmp.ne.s32.totalorder %s216, %s218
      %p222 = scmp.eq.s32.totalorder %s35, 0
      %p223 = por %p221, %p222
      %p224 = scmp.ne.s32.totalorder %s216, %s218
      %p225 = scmp.eq.s32.totalorder %s40, 1
      %p226 = por %p224, %p225
      %p227 = scmp.ne.s32.totalorder %s218, %s219
      %p228 = scmp.eq.s32.totalorder %s40, 0
      %p229 = por %p227, %p228
      %p230 = scmp.ne.s32.totalorder %s218, %s219
      %p231 = scmp.eq.s32.totalorder %s41, 1
      %p232 = por %p230, %p231
      %p234 = scmp.ne.s32.totalorder %s219, %s233
      %p235 = scmp.eq.s32.totalorder %s41, 0
      %p236 = por %p234, %p235
      %s238 = sadd.s32 %s237, 1
      %p241 = scmp.eq.s32.totalorder %s35, 1
      %p242 = scmp.ne.s32.totalorder %s237, %s239
      %p243 = scmp.eq.s32.totalorder %s35, 0
      %p244 = por %p242, %p243
      %p245 = scmp.ne.s32.totalorder %s237, %s239
      %p246 = scmp.eq.s32.totalorder %s40, 1
      %p247 = por %p245, %p246
      %p248 = scmp.ne.s32.totalorder %s239, %s240
      %p249 = scmp.eq.s32.totalorder %s40, 0
      %p250 = por %p248, %p249
      %p251 = scmp.ne.s32.totalorder %s239, %s240
      %p252 = scmp.eq.s32.totalorder %s41, 1
      %p253 = por %p251, %p252
      %p255 = scmp.ne.s32.totalorder %s240, %s254
      %p256 = scmp.eq.s32.totalorder %s41, 0
      %p257 = por %p255, %p256
      %s259 = sadd.s32 %s258, 1
      %p262 = scmp.eq.s32.totalorder %s35, 1
      %p263 = scmp.ne.s32.totalorder %s258, %s260
      %p264 = scmp.eq.s32.totalorder %s35, 0
      %p265 = por %p263, %p264
      %p266 = scmp.ne.s32.totalorder %s258, %s260
      %p267 = scmp.eq.s32.totalorder %s40, 1
      %p268 = por %p266, %p267
      %p269 = scmp.ne.s32.totalorder %s260, %s261
      %p270 = scmp.eq.s32.totalorder %s40, 0
      %p271 = por %p269, %p270
      %p272 = scmp.ne.s32.totalorder %s260, %s261
      %p273 = scmp.eq.s32.totalorder %s41, 1
      %p274 = por %p272, %p273
      %p276 = scmp.ne.s32.totalorder %s261, %s275
      %p277 = scmp.eq.s32.totalorder %s41, 0
      %p278 = por %p276, %p277
      %s279 = ssub.s32 %s35, %s42
      %p280 = scmp.eq.s32.totalorder %s279, 0
      %s282 = sadd.s32 %s281, 1
      %s283 = scalar_select %p280, %s281, %s282
      %p286 = pneg %p280
      %p287 = scmp.eq.s32.totalorder %s35, 1
      %p288 = por %p286, %p287
      %p289 = scmp.ne.s32.totalorder %s281, %s284
      %p290 = scmp.eq.s32.totalorder %s35, 0
      %p291 = por %p289, %p290
      %p292 = scmp.ne.s32.totalorder %s281, %s284
      %p293 = scmp.eq.s32.totalorder %s40, 1
      %p294 = por %p292, %p293
      %p295 = scmp.ne.s32.totalorder %s284, %s285
      %p296 = scmp.eq.s32.totalorder %s40, 0
      %p297 = por %p295, %p296
      %p298 = scmp.ne.s32.totalorder %s284, %s285
      %p299 = scmp.eq.s32.totalorder %s41, 1
      %p300 = por %p298, %p299
      %p302 = scmp.ne.s32.totalorder %s285, %s301
      %p303 = scmp.eq.s32.totalorder %s41, 0
      %p304 = por %p302, %p303
      %s305 = ssub.s32 %s35, %s42
      %p306 = scmp.eq.s32.totalorder %s305, 0
      %s308 = sadd.s32 %s307, 1
      %s309 = scalar_select %p306, %s307, %s308
      %p312 = pneg %p306
      %p313 = scmp.eq.s32.totalorder %s35, 1
      %p314 = por %p312, %p313
      %p315 = scmp.ne.s32.totalorder %s307, %s310
      %p316 = scmp.eq.s32.totalorder %s35, 0
      %p317 = por %p315, %p316
      %p318 = scmp.ne.s32.totalorder %s307, %s310
      %p319 = scmp.eq.s32.totalorder %s40, 1
      %p320 = por %p318, %p319
      %p321 = scmp.ne.s32.totalorder %s310, %s311
      %p322 = scmp.eq.s32.totalorder %s40, 0
      %p323 = por %p321, %p322
      %p324 = scmp.ne.s32.totalorder %s310, %s311
      %p325 = scmp.eq.s32.totalorder %s41, 1
      %p326 = por %p324, %p325
      %p328 = scmp.ne.s32.totalorder %s311, %s327
      %p329 = scmp.eq.s32.totalorder %s41, 0
      %p330 = por %p328, %p329
      %p331 = scmp.le.s32.totalorder 1, %s35
      %p332 = scmp.lt.s32.totalorder %s35, 3
      %p333 = pnand %p331, %p332
      %p334 = pneg %p333
      // Predicated region
      $region9: #{tpu_custom_call.1} parent=5 // pred_check
        _
      $region10: #{tpu_custom_call.1} parent=5 // pred_check_branch
        %336 = sbr.rel (%p333) target = $region12
      $region11: #{tpu_custom_call.1} parent=5 // pred_region
        %s337 = ssub.s32 %s35, 1
        // Predicated region
        $region13: #{tpu_custom_call.1} parent=11 // pred_check
          %p338 = pneg %p82
        $region14: #{tpu_custom_call.1} parent=11 // pred_check_branch
          %340 = sbr.rel (%p338) target = $region16
        $region15: #{tpu_custom_call.1} parent=11 // pred_region
          _
        $region16: #{tpu_custom_call.1} parent=11 // pred_fallthru
          _
        // Predicated region
        $region17: #{tpu_custom_call.1} parent=11 // pred_check
          %p341 = pneg %p103
        $region18: #{tpu_custom_call.1} parent=11 // pred_check_branch
          %343 = sbr.rel (%p341) target = $region20
        $region19: #{tpu_custom_call.1} parent=11 // pred_region
          _
        $region20: #{tpu_custom_call.1} parent=11 // pred_fallthru
          _
        // Predicated region
        $region21: #{tpu_custom_call.1} parent=11 // pred_check
          %p344 = pneg %p124
        $region22: #{tpu_custom_call.1} parent=11 // pred_check_branch
          %346 = sbr.rel (%p344) target = $region24
        $region23: #{tpu_custom_call.1} parent=11 // pred_region
          %s348 = ssub.s32 3072, 3072
          %349 = vsyncadd [#allocation8], %s348
          %s350 = sshll.u32 [#allocation7], 4
          %s351 = int_to_ptr.vmem [resolvable:$true] %s350
          %356 = dma.hbm_to_vmem [thread:$0]  %s4, 3072, %s351, [#allocation8], 192, 192, 12
        $region24: #{tpu_custom_call.1} parent=11 // pred_fallthru
          _
        // Predicated region
        $region25: #{tpu_custom_call.1} parent=11 // pred_check
          %p357 = pneg %p145
        $region26: #{tpu_custom_call.1} parent=11 // pred_check_branch
          %359 = sbr.rel (%p357) target = $region28
        $region27: #{tpu_custom_call.1} parent=11 // pred_region
          %s361 = ssub.s32 1024, 1024
          %362 = vsyncadd [#allocation8], %s361
          %s363 = sshll.u32 [#allocation9], 4
          %s364 = int_to_ptr.vmem [resolvable:$true] %s363
          %369 = dma.hbm_to_vmem [thread:$0]  %s5, 1024, %s364, [#allocation8], 64, 64, 4
        $region28: #{tpu_custom_call.1} parent=11 // pred_fallthru
          _
        // Predicated region
        $region29: #{tpu_custom_call.1} parent=11 // pred_check
          %p370 = pneg %p166
        $region30: #{tpu_custom_call.1} parent=11 // pred_check_branch
          %372 = sbr.rel (%p370) target = $region32
        $region31: #{tpu_custom_call.1} parent=11 // pred_region
          _
        $region32: #{tpu_custom_call.1} parent=11 // pred_fallthru
          _
        // Predicated region
        $region33: #{tpu_custom_call.1} parent=11 // pred_check
          %p373 = pneg %p187
        $region34: #{tpu_custom_call.1} parent=11 // pred_check_branch
          %375 = sbr.rel (%p373) target = $region36
        $region35: #{tpu_custom_call.1} parent=11 // pred_region
          _
        $region36: #{tpu_custom_call.1} parent=11 // pred_fallthru
          _
        // Predicated region
        $region37: #{tpu_custom_call.1} parent=11 // pred_check
          %p376 = pneg %p208
        $region38: #{tpu_custom_call.1} parent=11 // pred_check_branch
          %378 = sbr.rel (%p376) target = $region40
        $region39: #{tpu_custom_call.1} parent=11 // pred_region
          %s380 = ssub.s32 2048, 2048
          %381 = vsyncadd [#allocation11], %s380
          %s382 = sshll.u32 [#allocation10], 4
          %s383 = int_to_ptr.vmem [resolvable:$true] %s382
          %388 = dma.hbm_to_vmem [thread:$0]  %s8, 2048, %s383, [#allocation11], 128, 128, 8
        $region40: #{tpu_custom_call.1} parent=11 // pred_fallthru
          _
        // Predicated region
        $region41: #{tpu_custom_call.1} parent=11 // pred_check
          %p389 = pneg %p229
        $region42: #{tpu_custom_call.1} parent=11 // pred_check_branch
          %391 = sbr.rel (%p389) target = $region44
        $region43: #{tpu_custom_call.1} parent=11 // pred_region
          _
        $region44: #{tpu_custom_call.1} parent=11 // pred_fallthru
          _
        // Predicated region
        $region45: #{tpu_custom_call.1} parent=11 // pred_check
          %p392 = pneg %p250
        $region46: #{tpu_custom_call.1} parent=11 // pred_check_branch
          %394 = sbr.rel (%p392) target = $region48
        $region47: #{tpu_custom_call.1} parent=11 // pred_region
          %s396 = ssub.s32 2048, 2048
          %397 = vsyncadd [#allocation11], %s396
          %s398 = sshll.u32 [#allocation12], 4
          %s399 = int_to_ptr.vmem [resolvable:$true] %s398
          %404 = dma.hbm_to_vmem [thread:$0]  %s10, 2048, %s399, [#allocation11], 64, 64, 4
        $region48: #{tpu_custom_call.1} parent=11 // pred_fallthru
          _
        // Predicated region
        $region49: #{tpu_custom_call.1} parent=11 // pred_check
          %p405 = pneg %p271
        $region50: #{tpu_custom_call.1} parent=11 // pred_check_branch
          %407 = sbr.rel (%p405) target = $region52
        $region51: #{tpu_custom_call.1} parent=11 // pred_region
          _
        $region52: #{tpu_custom_call.1} parent=11 // pred_fallthru
          _
      $region12: #{tpu_custom_call.1} parent=5 // pred_fallthru
        _
      %p408 = scmp.lt.s32.totalorder %s35, 2
      // Predicated region
      $region53: #{tpu_custom_call.1} parent=5 // pred_check
        %p409 = pneg %p408
      $region54: #{tpu_custom_call.1} parent=5 // pred_check_branch
        %411 = sbr.rel (%p409) target = $region56
      $region55: #{tpu_custom_call.1} parent=5 // pred_region
        // Predicated region
        $region57: #{tpu_custom_call.1} parent=55 // pred_check
          %p412 = pneg %p55
        $region58: #{tpu_custom_call.1} parent=55 // pred_check_branch
          %414 = sbr.rel (%p412) target = $region60
        $region59: #{tpu_custom_call.1} parent=55 // pred_region
          %s415 = sand.u32 %s45, 1
          %s416 = scalar_lea.sflag [#allocation5], %s415
          %s417 = sand.u32 %s45, 1
          %s418 = smul.addr %s417, 16
          %s419 = scalar_lea.vmem [#allocation4], %s418
          %s420 = smul.u32 2, %s35
          %s422 = ssub.s32 256, 256
          %423 = vsyncadd %s416, %s422
          %s424 = smul.addr %s420, 128
          %s425 = scalar_lea.hbm %s1, %s424
          %s426 = sshll.u32 %s419, 4
          %s427 = int_to_ptr.vmem [resolvable:$true] %s426
          %432 = dma.hbm_to_vmem [thread:$0]  %s425, 256, %s427, %s416, 128, 128, 8
        $region60: #{tpu_custom_call.1} parent=55 // pred_fallthru
          _
      $region56: #{tpu_custom_call.1} parent=5 // pred_fallthru
        _
      %p433 = scmp.le.s32.totalorder 1, %s35
      %p434 = scmp.lt.s32.totalorder %s35, 3
      %p435 = pnand %p433, %p434
      %p436 = pneg %p435
      // Predicated region
      $region61: #{tpu_custom_call.1} parent=5 // pred_check
        _
      $region62: #{tpu_custom_call.1} parent=5 // pred_check_branch
        %438 = sbr.rel (%p435) target = $region64
      $region63: #{tpu_custom_call.1} parent=5 // pred_region
        %s439 = ssub.s32 %s35, 1
        %s440 = sand.u32 %s48, 1
        %s441 = scalar_lea.sflag [#allocation5], %s440
        %s442 = sand.u32 %s48, 1
        %s443 = smul.addr %s442, 16
        %s444 = scalar_lea.vmem [#allocation4], %s443
        // Predicated region
        $region65: #{tpu_custom_call.1} parent=63 // pred_check
          %p445 = pneg %p61
        $region66: #{tpu_custom_call.1} parent=63 // pred_check_branch
          %447 = sbr.rel (%p445) target = $region68
        $region67: #{tpu_custom_call.1} parent=63 // pred_region
          %448 = dma.done %s441, 256
        $region68: #{tpu_custom_call.1} parent=63 // pred_fallthru
          _
        // Predicated region
        $region69: #{tpu_custom_call.1} parent=63 // pred_check
          %p449 = pneg %p124
        $region70: #{tpu_custom_call.1} parent=63 // pred_check_branch
          %451 = sbr.rel (%p449) target = $region72
        $region71: #{tpu_custom_call.1} parent=63 // pred_region
          %452 = dma.done [#allocation8], 3072
        $region72: #{tpu_custom_call.1} parent=63 // pred_fallthru
          _
        // Predicated region
        $region73: #{tpu_custom_call.1} parent=63 // pred_check
          %p453 = pneg %p145
        $region74: #{tpu_custom_call.1} parent=63 // pred_check_branch
          %455 = sbr.rel (%p453) target = $region76
        $region75: #{tpu_custom_call.1} parent=63 // pred_region
          %456 = dma.done [#allocation8], 1024
        $region76: #{tpu_custom_call.1} parent=63 // pred_fallthru
          _
        // Predicated region
        $region77: #{tpu_custom_call.1} parent=63 // pred_check
          %p457 = pneg %p208
        $region78: #{tpu_custom_call.1} parent=63 // pred_check_branch
          %459 = sbr.rel (%p457) target = $region80
        $region79: #{tpu_custom_call.1} parent=63 // pred_region
          %460 = dma.done [#allocation11], 2048
        $region80: #{tpu_custom_call.1} parent=63 // pred_fallthru
          _
        // Predicated region
        $region81: #{tpu_custom_call.1} parent=63 // pred_check
          %p461 = pneg %p250
        $region82: #{tpu_custom_call.1} parent=63 // pred_check_branch
          %463 = sbr.rel (%p461) target = $region84
        $region83: #{tpu_custom_call.1} parent=63 // pred_region
          %464 = dma.done [#allocation11], 2048
        $region84: #{tpu_custom_call.1} parent=63 // pred_fallthru
          _
        %s465 = sand.u32 %s48, 1
        %s466 = scalar_lea.sflag [#allocation5], %s465
        %s467 = sand.u32 %s48, 1
        %s468 = smul.addr %s467, 16
        %s469 = scalar_lea.vmem [#allocation4], %s468
        %p470 = pneg %p61
        %p471 = pneg %p58
        %p472 = pneg %p82
        %p473 = pneg %p79
        %p474 = pneg %p103
        %p475 = pneg %p100
        %p476 = pneg %p124
        %p477 = pneg %p121
        %p478 = pneg %p145
        %p479 = pneg %p142
        %p480 = pneg %p166
        %p481 = pneg %p163
        %p482 = pneg %p187
        %p483 = pneg %p184
        %p484 = pneg %p208
        %p485 = pneg %p205
        %p486 = pneg %p229
        %p487 = pneg %p226
        %p488 = pneg %p250
        %p489 = pneg %p247
        %p490 = pneg %p271
        %p491 = pneg %p268
        %p492 = pneg %p297
        %p493 = pneg %p294
        %s494 = sand.u32 %s284, 1
        %s495 = scalar_lea.sflag [#allocation6], %s494
        %s496 = sand.u32 %s284, 1
        %s497 = smul.addr %s496, 16
        %s498 = scalar_lea.vmem [#allocation13], %s497
        %p499 = pneg %p323
        %p500 = pneg %p320
        %s501 = sand.u32 %s310, 1
        %s502 = scalar_lea.sflag [#allocation15], %s501
        %s503 = sand.u32 %s310, 1
        %s504 = smul.addr %s503, 2
        %s505 = scalar_lea.vmem [#allocation14], %s504
        %s506 = smul.u32 2, %s40
        %s507 = smul.u32 2, %s40
        %v509 = vld [vmem:[%s444] sm:$0xff]
        %v510 = vld [vmem:[%s444 + $0x8] sm:$0xff]
        %v511 = vld [vmem:[%s2] sm:$0x1]
        %v512 = vld [vmem:[%s3] sm:$0x1]
        %513 = vadd.xlane.f32.xlu0 %v509
        %v514 = vpop.xlane.xlu0 %513
        %515 = vadd.xlane.f32.xlu0 %v510
        %v516 = vpop.xlane.xlu0 %515
        %v517 = vrcp.pop 128.0
        %v518 = vmul.f32 %v514, %v517
        %v519 = vmul.f32 %v516, %v517
        %v520 = vsub.f32 %v509, %v518
        %v521 = vsub.f32 %v510, %v519
        %v522 = vmul.f32 %v520, %v520
        %v523 = vmul.f32 %v521, %v521
        %524 = vadd.xlane.f32.xlu0 %v522
        %v525 = vpop.xlane.xlu0 %524
        %526 = vadd.xlane.f32.xlu0 %v523
        %v527 = vpop.xlane.xlu0 %526
        %v528 = vmul.f32 %v525, %v517
        %v529 = vmul.f32 %v527, %v517
        %v530 = vadd.f32 %v528, 1e-05
        %v531 = vadd.f32 %v529, 1e-05
        %v532 = vrsqrt.pop %v530
        %v533 = vrsqrt.pop %v531
        %v534 = vmul.f32 %v520, %v532
        %v535 = vmul.f32 %v521, %v533
        %v537 = vlaneseq
        %v538 = vshrl.u32 %v537, 7
        %v539 = vsub.s32 0, %v538
        %v540 = vrot.slane %v511, %v539
        %v542 = vmul.f32 %v534, %v540
        %v543 = vmul.f32 %v535, %v540
        %v545 = vlaneseq
        %v546 = vshrl.u32 %v545, 7
        %v547 = vsub.s32 0, %v546
        %v548 = vrot.slane %v512, %v547
        %v550 = vadd.f32 %v542, %v548
        %v551 = vadd.f32 %v543, %v548
        %v552 = vpack.c.bf16 %v551, %v550
        %v553 = vld [vmem:[#allocation7] sm:$0xff]
        %v554 = vld [vmem:[#allocation7 + $0x8] sm:$0xf]
        %v555 = vld [vmem:[#allocation7 + $0xc] sm:$0xff]
        %v556 = vld [vmem:[#allocation7 + $0x14] sm:$0xf]
        %v557 = vld [vmem:[#allocation7 + $0x18] sm:$0xff]
        %v558 = vld [vmem:[#allocation7 + $0x20] sm:$0xf]
        %v559 = vld [vmem:[#allocation7 + $0x24] sm:$0xff]
        %v560 = vld [vmem:[#allocation7 + $0x2c] sm:$0xf]
        %v561 = vld [vmem:[#allocation7 + $0x30] sm:$0xff]
        %v562 = vld [vmem:[#allocation7 + $0x38] sm:$0xf]
        %v563 = vld [vmem:[#allocation7 + $0x3c] sm:$0xff]
        %v564 = vld [vmem:[#allocation7 + $0x44] sm:$0xf]
        %v565 = vld [vmem:[#allocation7 + $0x48] sm:$0xff]
        %v566 = vld [vmem:[#allocation7 + $0x50] sm:$0xf]
        %v567 = vld [vmem:[#allocation7 + $0x54] sm:$0xff]
        %v568 = vld [vmem:[#allocation7 + $0x5c] sm:$0xf]
        %v569 = vld [vmem:[#allocation7 + $0x60] sm:$0xff]
        %v570 = vld [vmem:[#allocation7 + $0x68] sm:$0xf]
        %v571 = vld [vmem:[#allocation7 + $0x6c] sm:$0xff]
        %v572 = vld [vmem:[#allocation7 + $0x74] sm:$0xf]
        %v573 = vld [vmem:[#allocation7 + $0x78] sm:$0xff]
        %v574 = vld [vmem:[#allocation7 + $0x80] sm:$0xf]
        %v575 = vld [vmem:[#allocation7 + $0x84] sm:$0xff]
        %v576 = vld [vmem:[#allocation7 + $0x8c] sm:$0xf]
        %v577 = vld [vmem:[#allocation7 + $0x90] sm:$0xff]
        %v578 = vld [vmem:[#allocation7 + $0x98] sm:$0xf]
        %v579 = vld [vmem:[#allocation7 + $0x9c] sm:$0xff]
        %v580 = vld [vmem:[#allocation7 + $0xa4] sm:$0xf]
        %v581 = vld [vmem:[#allocation7 + $0xa8] sm:$0xff]
        %v582 = vld [vmem:[#allocation7 + $0xb0] sm:$0xf]
        %v583 = vld [vmem:[#allocation7 + $0xb4] sm:$0xff]
        %v584 = vld [vmem:[#allocation7 + $0xbc] sm:$0xf]
        %v617 = vunpack.c.l.b16 %v553
        %v618 = vunpack.c.h.b16 %v553
        %v619 = vunpack.c.l.b16 %v554
        %v620 = vunpack.c.l.b16 %v555
        %v621 = vunpack.c.h.b16 %v555
        %v622 = vunpack.c.l.b16 %v556
        %v623 = vunpack.c.l.b16 %v557
        %v624 = vunpack.c.h.b16 %v557
        %v625 = vunpack.c.l.b16 %v558
        %v626 = vunpack.c.l.b16 %v559
        %v627 = vunpack.c.h.b16 %v559
        %v628 = vunpack.c.l.b16 %v560
        %v629 = vunpack.c.l.b16 %v561
        %v630 = vunpack.c.h.b16 %v561
        %v631 = vunpack.c.l.b16 %v562
        %v632 = vunpack.c.l.b16 %v563
        %v633 = vunpack.c.h.b16 %v563
        %v634 = vunpack.c.l.b16 %v564
        %v635 = vunpack.c.l.b16 %v565
        %v636 = vunpack.c.h.b16 %v565
        %v637 = vunpack.c.l.b16 %v566
        %v638 = vunpack.c.l.b16 %v567
        %v639 = vunpack.c.h.b16 %v567
        %v640 = vunpack.c.l.b16 %v568
        %v641 = vunpack.c.l.b16 %v569
        %v642 = vunpack.c.h.b16 %v569
        %v643 = vunpack.c.l.b16 %v570
        %v644 = vunpack.c.l.b16 %v571
        %v645 = vunpack.c.h.b16 %v571
        %v646 = vunpack.c.l.b16 %v572
        %v647 = vunpack.c.l.b16 %v573
        %v648 = vunpack.c.h.b16 %v573
        %v649 = vunpack.c.l.b16 %v574
        %v650 = vunpack.c.l.b16 %v575
        %v651 = vunpack.c.h.b16 %v575
        %v652 = vunpack.c.l.b16 %v576
        %v653 = vunpack.c.l.b16 %v577
        %v654 = vunpack.c.h.b16 %v577
        %v655 = vunpack.c.l.b16 %v578
        %v656 = vunpack.c.l.b16 %v579
        %v657 = vunpack.c.h.b16 %v579
        %v658 = vunpack.c.l.b16 %v580
        %v659 = vunpack.c.l.b16 %v581
        %v660 = vunpack.c.h.b16 %v581
        %v661 = vunpack.c.l.b16 %v582
        %v662 = vunpack.c.l.b16 %v583
        %v663 = vunpack.c.h.b16 %v583
        %v664 = vunpack.c.l.b16 %v584
        %v665 = vpack.c.b16 %v620, %v617
        %v666 = vpack.c.b16 %v621, %v618
        %v667 = vpack.c.b16 %v622, %v619
        %v668 = vpack.c.b16 %v626, %v623
        %v669 = vpack.c.b16 %v627, %v624
        %v670 = vpack.c.b16 %v628, %v625
        %v671 = vpack.c.b16 %v632, %v629
        %v672 = vpack.c.b16 %v633, %v630
        %v673 = vpack.c.b16 %v634, %v631
        %v674 = vpack.c.b16 %v638, %v635
        %v675 = vpack.c.b16 %v639, %v636
        %v676 = vpack.c.b16 %v640, %v637
        %v677 = vpack.c.b16 %v644, %v641
        %v678 = vpack.c.b16 %v645, %v642
        %v679 = vpack.c.b16 %v646, %v643
        %v680 = vpack.c.b16 %v650, %v647
        %v681 = vpack.c.b16 %v651, %v648
        %v682 = vpack.c.b16 %v652, %v649
        %v683 = vpack.c.b16 %v656, %v653
        %v684 = vpack.c.b16 %v657, %v654
        %v685 = vpack.c.b16 %v658, %v655
        %v686 = vpack.c.b16 %v662, %v659
        %v687 = vpack.c.b16 %v663, %v660
        %v688 = vpack.c.b16 %v664, %v661
        %713 = vmatprep.subr.bf16.mxu0 %v666
        %714 = vmatpush1.bf16.msra.mxu0 %v665
        %715 = vmatprep.subr.bf16.mxu0 %v669
        %716 = vmatpush1.bf16.msra.mxu0 %v668
        %717 = vmatprep.subr.bf16.mxu0 %v672
        %718 = vmatpush1.bf16.msra.mxu0 %v671
        %719 = vmatprep.subr.bf16.mxu0 %v675
        %720 = vmatpush1.bf16.msra.mxu0 %v674
        %721 = vmatprep.subr.bf16.mxu0 %v678
        %722 = vmatpush1.bf16.msra.mxu0 %v677
        %723 = vmatprep.subr.bf16.mxu0 %v681
        %724 = vmatpush1.bf16.msra.mxu0 %v680
        %725 = vmatprep.subr.bf16.mxu0 %v684
        %726 = vmatpush1.bf16.msra.mxu0 %v683
        %727 = vmatprep.subr.bf16.mxu0 %v687
        %728 = vmatpush1.bf16.msra.mxu0 %v686
        %729 = vmatprep.subr.bf16.mxu0 0
        %730 = vmatpush1.bf16.msra.mxu0 0
        %731 = vmatprep.subr.bf16.mxu0 0
        %732 = vmatpush1.bf16.msra.mxu0 0
        %733 = vmatprep.subr.bf16.mxu0 0
        %734 = vmatpush1.bf16.msra.mxu0 0
        %735 = vmatprep.subr.bf16.mxu0 0
        %736 = vmatpush1.bf16.msra.mxu0 0
        %737 = vmatprep.subr.bf16.mxu0 0
        %738 = vmatpush1.bf16.msra.mxu0 0
        %739 = vmatprep.subr.bf16.mxu0 0
        %740 = vmatpush1.bf16.msra.mxu0 0
        %741 = vmatprep.subr.bf16.mxu0 0
        %742 = vmatpush1.bf16.msra.mxu0 0
        %743 = vmatprep.subr.bf16.mxu0 0
        %744 = vmatpush1.bf16.msra.mxu0 0
        %745 = vmatprep.mubr.bf16.mxu0 0
        %746 = vmatmul.mubr.bf16.gmra.mrb[0].mxu0 %v552
        %v747 = vpop.f32.mrb[0].mxu0
        %v748 = vadd.f32 0.0, %v747
        %v749 = vpop.f32.mrb[0].mxu0
        %v750 = vadd.f32 0.0, %v749
        %v751 = vpop.f32.mrb[0].mxu0
        %v752 = vadd.f32 0.0, %v751
        %v753 = vpop.f32.mrb[0].mxu0
        %v754 = vadd.f32 0.0, %v753
        %755 = vdwg.mxu0
        %756 = vmatprep.subr.bf16.mxu0 0
        %757 = vmatpush1.bf16.msra.mxu0 %v667
        %758 = vmatprep.subr.bf16.mxu0 0
        %759 = vmatpush1.bf16.msra.mxu0 %v670
        %760 = vmatprep.subr.bf16.mxu0 0
        %761 = vmatpush1.bf16.msra.mxu0 %v673
        %762 = vmatprep.subr.bf16.mxu0 0
        %763 = vmatpush1.bf16.msra.mxu0 %v676
        %764 = vmatprep.subr.bf16.mxu0 0
        %765 = vmatpush1.bf16.msra.mxu0 %v679
        %766 = vmatprep.subr.bf16.mxu0 0
        %767 = vmatpush1.bf16.msra.mxu0 %v682
        %768 = vmatprep.subr.bf16.mxu0 0
        %769 = vmatpush1.bf16.msra.mxu0 %v685
        %770 = vmatprep.subr.bf16.mxu0 0
        %771 = vmatpush1.bf16.msra.mxu0 %v688
        %772 = vmatprep.subr.bf16.mxu0 0
        %773 = vmatpush1.bf16.msra.mxu0 0
        %774 = vmatprep.subr.bf16.mxu0 0
        %775 = vmatpush1.bf16.msra.mxu0 0
        %776 = vmatprep.subr.bf16.mxu0 0
        %777 = vmatpush1.bf16.msra.mxu0 0
        %778 = vmatprep.subr.bf16.mxu0 0
        %779 = vmatpush1.bf16.msra.mxu0 0
        %780 = vmatprep.subr.bf16.mxu0 0
        %781 = vmatpush1.bf16.msra.mxu0 0
        %782 = vmatprep.subr.bf16.mxu0 0
        %783 = vmatpush1.bf16.msra.mxu0 0
        %784 = vmatprep.subr.bf16.mxu0 0
        %785 = vmatpush1.bf16.msra.mxu0 0
        %786 = vmatprep.subr.bf16.mxu0 0
        %787 = vmatpush1.bf16.msra.mxu0 0
        %788 = vmatprep.mubr.bf16.mxu0 0
        %789 = vmatmul.mubr.bf16.gmra.mrb[0].mxu0 %v552
        %v790 = vpop.f32.mrb[0].mxu0
        %v791 = vadd.f32 0.0, %v790
        %v792 = vpop.f32.mrb[0].mxu0
        %v793 = vpop.f32.mrb[0].mxu0
        %v794 = vadd.f32 0.0, %v793
        %v795 = vpop.f32.mrb[0].mxu0
        %796 = vdwg.mxu0
        %v797 = vpack.c.bf16 %v752, %v748
        %v799 = vunpack.c.l.b16 %v797
        %v800 = vunpack.c.h.b16 %v797
        %v801 = vpack.c.b16 %v799, %v799
        %v802 = vpack.c.b16 %v800, %v800
        %v805 = vpack.c.bf16 %v754, %v750
        %v807 = vunpack.c.l.b16 %v805
        %v808 = vunpack.c.h.b16 %v805
        %v809 = vpack.c.b16 %v807, %v807
        %v810 = vpack.c.b16 %v808, %v808
        %v813 = vpack.c.bf16 %v794, %v791
        %v815 = vunpack.c.l.b16 %v813
        %v816 = vunpack.c.h.b16 %v813
        %v817 = vpack.c.b16 %v815, %v815
        %v818 = vpack.c.b16 %v816, %v816
        %819 = vmatprep.subr.bf16.mxu0 0
        %820 = vmatpush1.bf16.xpose.msra.mxu0 %v809
        %821 = vmatprep.subr.bf16.mxu0 0
        %822 = vmatpush1.bf16.xpose.msra.mxu0 0
        %823 = vmatprep.subr.bf16.mxu0 0
        %824 = vmatpush1.bf16.xpose.msra.mxu0 0
        %825 = vmatprep.subr.bf16.mxu0 0
        %826 = vmatpush1.bf16.xpose.msra.mxu0 0
        %827 = vmatprep.subr.bf16.mxu0 0
        %828 = vmatpush1.bf16.xpose.msra.mxu0 0
        %829 = vmatprep.subr.bf16.mxu0 0
        %830 = vmatpush1.bf16.xpose.msra.mxu0 0
        %831 = vmatprep.subr.bf16.mxu0 0
        %832 = vmatpush1.bf16.xpose.msra.mxu0 0
        %833 = vmatprep.subr.bf16.mxu0 0
        %834 = vmatpush1.bf16.xpose.msra.mxu0 0
        %835 = vmatprep.subr.bf16.mxu0 0
        %836 = vmatpush1.bf16.xpose.msra.mxu0 0
        %837 = vmatprep.subr.bf16.mxu0 0
        %838 = vmatpush1.bf16.xpose.msra.mxu0 0
        %839 = vmatprep.subr.bf16.mxu0 0
        %840 = vmatpush1.bf16.xpose.msra.mxu0 0
        %841 = vmatprep.subr.bf16.mxu0 0
        %842 = vmatpush1.bf16.xpose.msra.mxu0 0
        %843 = vmatprep.subr.bf16.mxu0 0
        %844 = vmatpush1.bf16.xpose.msra.mxu0 0
        %845 = vmatprep.subr.bf16.mxu0 0
        %846 = vmatpush1.bf16.xpose.msra.mxu0 0
        %847 = vmatprep.subr.bf16.mxu0 0
        %848 = vmatpush1.bf16.xpose.msra.mxu0 0
        %849 = vmatprep.subr.bf16.mxu0 0
        %850 = vmatpush1.bf16.xpose.msra.mxu0 0
        %851 = vmatprep.mubr.bf16.mxu0 0
        %852 = vmatmul.mubr.bf16.gmra.mrb[0].mxu0 %v801
        %v853 = vpop.f32.mrb[0].mxu0
        %v854 = vadd.f32 0.0, %v853
        %v855 = vpop.f32.mrb[0].mxu0
        %v856 = vpop.f32.mrb[0].mxu0
        %v857 = vpop.f32.mrb[0].mxu0
        %858 = vdwg.mxu0
        %859 = vmatprep.subr.bf16.mxu0 0
        %860 = vmatpush1.bf16.xpose.msra.mxu0 %v810
        %861 = vmatprep.subr.bf16.mxu0 0
        %862 = vmatpush1.bf16.xpose.msra.mxu0 0
        %863 = vmatprep.subr.bf16.mxu0 0
        %864 = vmatpush1.bf16.xpose.msra.mxu0 0
        %865 = vmatprep.subr.bf16.mxu0 0
        %866 = vmatpush1.bf16.xpose.msra.mxu0 0
        %867 = vmatprep.subr.bf16.mxu0 0
        %868 = vmatpush1.bf16.xpose.msra.mxu0 0
        %869 = vmatprep.subr.bf16.mxu0 0
        %870 = vmatpush1.bf16.xpose.msra.mxu0 0
        %871 = vmatprep.subr.bf16.mxu0 0
        %872 = vmatpush1.bf16.xpose.msra.mxu0 0
        %873 = vmatprep.subr.bf16.mxu0 0
        %874 = vmatpush1.bf16.xpose.msra.mxu0 0
        %875 = vmatprep.subr.bf16.mxu0 0
        %876 = vmatpush1.bf16.xpose.msra.mxu0 0
        %877 = vmatprep.subr.bf16.mxu0 0
        %878 = vmatpush1.bf16.xpose.msra.mxu0 0
        %879 = vmatprep.subr.bf16.mxu0 0
        %880 = vmatpush1.bf16.xpose.msra.mxu0 0
        %881 = vmatprep.subr.bf16.mxu0 0
        %882 = vmatpush1.bf16.xpose.msra.mxu0 0
        %883 = vmatprep.subr.bf16.mxu0 0
        %884 = vmatpush1.bf16.xpose.msra.mxu0 0
        %885 = vmatprep.subr.bf16.mxu0 0
        %886 = vmatpush1.bf16.xpose.msra.mxu0 0
        %887 = vmatprep.subr.bf16.mxu0 0
        %888 = vmatpush1.bf16.xpose.msra.mxu0 0
        %889 = vmatprep.subr.bf16.mxu0 0
        %890 = vmatpush1.bf16.xpose.msra.mxu0 0
        %891 = vmatprep.mubr.bf16.mxu0 0
        %892 = vmatmul.mubr.bf16.gmra.mrb[0].mxu0 %v802
        %v893 = vpop.f32.mrb[0].mxu0
        %v894 = vadd.f32 0.0, %v893
        %v895 = vpop.f32.mrb[0].mxu0
        %v896 = vpop.f32.mrb[0].mxu0
        %v897 = vpop.f32.mrb[0].mxu0
        %898 = vdwg.mxu0
        %v899 = vmul.f32 %v854, 0.088388346
        %v900 = vmul.f32 %v894, 0.088388346
        %vm901 = vcmask 64512
        %v902 = vsel %vm901, %v899, -inf
        %903 = vmax.xlane.f32.xlu0 %v902
        %v904 = vpop.xlane.xlu0 %903
        %v905 = vsel %vm901, %v900, -inf
        %906 = vmax.xlane.f32.xlu0 %v905
        %v907 = vpop.xlane.xlu0 %906
        %v908 = vsub.f32 %v899, %v904
        %v909 = vsub.f32 %v900, %v907
        %v910 = vmul.f32 %v908, 1.442695
        %v911 = vpow.pop %v910
        %v912 = vmul.f32 %v909, 1.442695
        %v913 = vpow.pop %v912
        %v914 = vsel %vm901, %v911, 0.0
        %915 = vadd.xlane.f32.xlu0 %v914
        %v916 = vpop.xlane.xlu0 %915
        %v917 = vsel %vm901, %v913, 0.0
        %918 = vadd.xlane.f32.xlu0 %v917
        %v919 = vpop.xlane.xlu0 %918
        %v920 = vrcp.pop %v916
        %v921 = vrcp.pop %v919
        %v922 = vmul.f32 %v911, %v920
        %v923 = vmul.f32 %v913, %v921
        %v924 = vpack.c.bf16 %v922, %v922
        %v925 = vpack.c.bf16 %v923, %v923
        %v927 = vsel %vm901, %v924, 0
        %vm929 = vcmask 1043456
        %v931 = vsel %vm929, %v817, 0
        %933 = vmatprep.subr.bf16.mxu0 0
        %934 = vmatpush1.bf16.msra.mxu0 %v931
        %935 = vmatprep.subr.bf16.mxu0 0
        %936 = vmatpush1.bf16.msra.mxu0 0
        %937 = vmatprep.subr.bf16.mxu0 0
        %938 = vmatpush1.bf16.msra.mxu0 0
        %939 = vmatprep.subr.bf16.mxu0 0
        %940 = vmatpush1.bf16.msra.mxu0 0
        %941 = vmatprep.subr.bf16.mxu0 0
        %942 = vmatpush1.bf16.msra.mxu0 0
        %943 = vmatprep.subr.bf16.mxu0 0
        %944 = vmatpush1.bf16.msra.mxu0 0
        %945 = vmatprep.subr.bf16.mxu0 0
        %946 = vmatpush1.bf16.msra.mxu0 0
        %947 = vmatprep.subr.bf16.mxu0 0
        %948 = vmatpush1.bf16.msra.mxu0 0
        %949 = vmatprep.subr.bf16.mxu0 0
        %950 = vmatpush1.bf16.msra.mxu0 0
        %951 = vmatprep.subr.bf16.mxu0 0
        %952 = vmatpush1.bf16.msra.mxu0 0
        %953 = vmatprep.subr.bf16.mxu0 0
        %954 = vmatpush1.bf16.msra.mxu0 0
        %955 = vmatprep.subr.bf16.mxu0 0
        %956 = vmatpush1.bf16.msra.mxu0 0
        %957 = vmatprep.subr.bf16.mxu0 0
        %958 = vmatpush1.bf16.msra.mxu0 0
        %959 = vmatprep.subr.bf16.mxu0 0
        %960 = vmatpush1.bf16.msra.mxu0 0
        %961 = vmatprep.subr.bf16.mxu0 0
        %962 = vmatpush1.bf16.msra.mxu0 0
        %963 = vmatprep.subr.bf16.mxu0 0
        %964 = vmatpush1.bf16.msra.mxu0 0
        %965 = vmatprep.mubr.bf16.mxu0 0
        %966 = vmatmul.mubr.bf16.gmra.mrb[0].mxu0 %v927
        %v967 = vpop.f32.mrb[0].mxu0
        %v968 = vadd.f32 0.0, %v967
        %v969 = vpop.f32.mrb[0].mxu0
        %v970 = vpop.f32.mrb[0].mxu0
        %v971 = vpop.f32.mrb[0].mxu0
        %972 = vdwg.mxu0
        %v974 = vsel %vm901, %v925, 0
        %v977 = vsel %vm929, %v818, 0
        %979 = vmatprep.subr.bf16.mxu0 0
        %980 = vmatpush1.bf16.msra.mxu0 %v977
        %981 = vmatprep.subr.bf16.mxu0 0
        %982 = vmatpush1.bf16.msra.mxu0 0
        %983 = vmatprep.subr.bf16.mxu0 0
        %984 = vmatpush1.bf16.msra.mxu0 0
        %985 = vmatprep.subr.bf16.mxu0 0
        %986 = vmatpush1.bf16.msra.mxu0 0
        %987 = vmatprep.subr.bf16.mxu0 0
        %988 = vmatpush1.bf16.msra.mxu0 0
        %989 = vmatprep.subr.bf16.mxu0 0
        %990 = vmatpush1.bf16.msra.mxu0 0
        %991 = vmatprep.subr.bf16.mxu0 0
        %992 = vmatpush1.bf16.msra.mxu0 0
        %993 = vmatprep.subr.bf16.mxu0 0
        %994 = vmatpush1.bf16.msra.mxu0 0
        %995 = vmatprep.subr.bf16.mxu0 0
        %996 = vmatpush1.bf16.msra.mxu0 0
        %997 = vmatprep.subr.bf16.mxu0 0
        %998 = vmatpush1.bf16.msra.mxu0 0
        %999 = vmatprep.subr.bf16.mxu0 0
        %1000 = vmatpush1.bf16.msra.mxu0 0
        %1001 = vmatprep.subr.bf16.mxu0 0
        %1002 = vmatpush1.bf16.msra.mxu0 0
        %1003 = vmatprep.subr.bf16.mxu0 0
        %1004 = vmatpush1.bf16.msra.mxu0 0
        %1005 = vmatprep.subr.bf16.mxu0 0
        %1006 = vmatpush1.bf16.msra.mxu0 0
        %1007 = vmatprep.subr.bf16.mxu0 0
        %1008 = vmatpush1.bf16.msra.mxu0 0
        %1009 = vmatprep.subr.bf16.mxu0 0
        %1010 = vmatpush1.bf16.msra.mxu0 0
        %1011 = vmatprep.mubr.bf16.mxu0 0
        %1012 = vmatmul.mubr.bf16.gmra.mrb[0].mxu0 %v974
        %v1013 = vpop.f32.mrb[0].mxu0
        %v1014 = vadd.f32 0.0, %v1013
        %v1015 = vpop.f32.mrb[0].mxu0
        %v1016 = vpop.f32.mrb[0].mxu0
        %v1017 = vpop.f32.mrb[0].mxu0
        %1018 = vdwg.mxu0
        %v1019 = vpack.c.bf16 %v1014, %v968
        %v1020 = vld [vmem:[#allocation9] sm:$0xf]
        %v1021 = vld [vmem:[#allocation9 + $0x4] sm:$0xf]
        %v1022 = vld [vmem:[#allocation9 + $0x8] sm:$0xf]
        %v1023 = vld [vmem:[#allocation9 + $0xc] sm:$0xf]
        %v1024 = vld [vmem:[#allocation9 + $0x10] sm:$0xf]
        %v1025 = vld [vmem:[#allocation9 + $0x14] sm:$0xf]
        %v1026 = vld [vmem:[#allocation9 + $0x18] sm:$0xf]
        %v1027 = vld [vmem:[#allocation9 + $0x1c] sm:$0xf]
        %v1028 = vld [vmem:[#allocation9 + $0x20] sm:$0xf]
        %v1029 = vld [vmem:[#allocation9 + $0x24] sm:$0xf]
        %v1030 = vld [vmem:[#allocation9 + $0x28] sm:$0xf]
        %v1031 = vld [vmem:[#allocation9 + $0x2c] sm:$0xf]
        %v1032 = vld [vmem:[#allocation9 + $0x30] sm:$0xf]
        %v1033 = vld [vmem:[#allocation9 + $0x34] sm:$0xf]
        %v1034 = vld [vmem:[#allocation9 + $0x38] sm:$0xf]
        %v1035 = vld [vmem:[#allocation9 + $0x3c] sm:$0xf]
        %v1052 = vunpack.c.l.b16 %v1020
        %v1053 = vunpack.c.l.b16 %v1021
        %v1054 = vunpack.c.l.b16 %v1022
        %v1055 = vunpack.c.l.b16 %v1023
        %v1056 = vunpack.c.l.b16 %v1024
        %v1057 = vunpack.c.l.b16 %v1025
        %v1058 = vunpack.c.l.b16 %v1026
        %v1059 = vunpack.c.l.b16 %v1027
        %v1060 = vunpack.c.l.b16 %v1028
        %v1061 = vunpack.c.l.b16 %v1029
        %v1062 = vunpack.c.l.b16 %v1030
        %v1063 = vunpack.c.l.b16 %v1031
        %v1064 = vunpack.c.l.b16 %v1032
        %v1065 = vunpack.c.l.b16 %v1033
        %v1066 = vunpack.c.l.b16 %v1034
        %v1067 = vunpack.c.l.b16 %v1035
        %v1068 = vpack.c.b16 %v1053, %v1052
        %v1069 = vpack.c.b16 %v1055, %v1054
        %v1070 = vpack.c.b16 %v1057, %v1056
        %v1071 = vpack.c.b16 %v1059, %v1058
        %v1072 = vpack.c.b16 %v1061, %v1060
        %v1073 = vpack.c.b16 %v1063, %v1062
        %v1074 = vpack.c.b16 %v1065, %v1064
        %v1075 = vpack.c.b16 %v1067, %v1066
        %1084 = vmatprep.subr.bf16.mxu0 0
        %1085 = vmatpush1.bf16.msra.mxu0 %v1068
        %1086 = vmatprep.subr.bf16.mxu0 0
        %1087 = vmatpush1.bf16.msra.mxu0 %v1069
        %1088 = vmatprep.subr.bf16.mxu0 0
        %1089 = vmatpush1.bf16.msra.mxu0 %v1070
        %1090 = vmatprep.subr.bf16.mxu0 0
        %1091 = vmatpush1.bf16.msra.mxu0 %v1071
        %1092 = vmatprep.subr.bf16.mxu0 0
        %1093 = vmatpush1.bf16.msra.mxu0 %v1072
        %1094 = vmatprep.subr.bf16.mxu0 0
        %1095 = vmatpush1.bf16.msra.mxu0 %v1073
        %1096 = vmatprep.subr.bf16.mxu0 0
        %1097 = vmatpush1.bf16.msra.mxu0 %v1074
        %1098 = vmatprep.subr.bf16.mxu0 0
        %1099 = vmatpush1.bf16.msra.mxu0 %v1075
        %1100 = vmatprep.subr.bf16.mxu0 0
        %1101 = vmatpush1.bf16.msra.mxu0 0
        %1102 = vmatprep.subr.bf16.mxu0 0
        %1103 = vmatpush1.bf16.msra.mxu0 0
        %1104 = vmatprep.subr.bf16.mxu0 0
        %1105 = vmatpush1.bf16.msra.mxu0 0
        %1106 = vmatprep.subr.bf16.mxu0 0
        %1107 = vmatpush1.bf16.msra.mxu0 0
        %1108 = vmatprep.subr.bf16.mxu0 0
        %1109 = vmatpush1.bf16.msra.mxu0 0
        %1110 = vmatprep.subr.bf16.mxu0 0
        %1111 = vmatpush1.bf16.msra.mxu0 0
        %1112 = vmatprep.subr.bf16.mxu0 0
        %1113 = vmatpush1.bf16.msra.mxu0 0
        %1114 = vmatprep.subr.bf16.mxu0 0
        %1115 = vmatpush1.bf16.msra.mxu0 0
        %1116 = vmatprep.mubr.bf16.mxu0 0
        %1117 = vmatmul.mubr.bf16.gmra.mrb[0].mxu0 %v1019
        %v1118 = vpop.f32.mrb[0].mxu0
        %v1119 = vadd.f32 0.0, %v1118
        %v1120 = vpop.f32.mrb[0].mxu0
        %v1121 = vpop.f32.mrb[0].mxu0
        %v1122 = vadd.f32 0.0, %v1121
        %v1123 = vpop.f32.mrb[0].mxu0
        %1124 = vdwg.mxu0
        %v1125 = vadd.f32 %v509, %v1119
        %v1126 = vadd.f32 %v510, %v1122
        %v1127 = vld [vmem:[%s6] sm:$0x1]
        %v1128 = vld [vmem:[%s7] sm:$0x1]
        %1129 = vadd.xlane.f32.xlu0 %v1125
        %v1130 = vpop.xlane.xlu0 %1129
        %1131 = vadd.xlane.f32.xlu0 %v1126
        %v1132 = vpop.xlane.xlu0 %1131
        %v1133 = vmul.f32 %v1130, %v517
        %v1134 = vmul.f32 %v1132, %v517
        %v1135 = vsub.f32 %v1125, %v1133
        %v1136 = vsub.f32 %v1126, %v1134
        %v1137 = vmul.f32 %v1135, %v1135
        %v1138 = vmul.f32 %v1136, %v1136
        %1139 = vadd.xlane.f32.xlu0 %v1137
        %v1140 = vpop.xlane.xlu0 %1139
        %1141 = vadd.xlane.f32.xlu0 %v1138
        %v1142 = vpop.xlane.xlu0 %1141
        %v1143 = vmul.f32 %v1140, %v517
        %v1144 = vmul.f32 %v1142, %v517
        %v1145 = vadd.f32 %v1143, 1e-05
        %v1146 = vadd.f32 %v1144, 1e-05
        %v1147 = vrsqrt.pop %v1145
        %v1148 = vrsqrt.pop %v1146
        %v1149 = vmul.f32 %v1135, %v1147
        %v1150 = vmul.f32 %v1136, %v1148
        %v1152 = vlaneseq
        %v1153 = vshrl.u32 %v1152, 7
        %v1154 = vsub.s32 0, %v1153
        %v1155 = vrot.slane %v1127, %v1154
        %v1157 = vmul.f32 %v1149, %v1155
        %v1158 = vmul.f32 %v1150, %v1155
        %v1160 = vlaneseq
        %v1161 = vshrl.u32 %v1160, 7
        %v1162 = vsub.s32 0, %v1161
        %v1163 = vrot.slane %v1128, %v1162
        %v1165 = vadd.f32 %v1157, %v1163
        %v1166 = vadd.f32 %v1158, %v1163
        %v1167 = vpack.c.bf16 %v1166, %v1165
        %v1168 = vld [vmem:[#allocation10] sm:$0xff]
        %v1169 = vld [vmem:[#allocation10 + $0x8] sm:$0xff]
        %v1170 = vld [vmem:[#allocation10 + $0x10] sm:$0xff]
        %v1171 = vld [vmem:[#allocation10 + $0x18] sm:$0xff]
        %v1172 = vld [vmem:[#allocation10 + $0x20] sm:$0xff]
        %v1173 = vld [vmem:[#allocation10 + $0x28] sm:$0xff]
        %v1174 = vld [vmem:[#allocation10 + $0x30] sm:$0xff]
        %v1175 = vld [vmem:[#allocation10 + $0x38] sm:$0xff]
        %v1176 = vld [vmem:[#allocation10 + $0x40] sm:$0xff]
        %v1177 = vld [vmem:[#allocation10 + $0x48] sm:$0xff]
        %v1178 = vld [vmem:[#allocation10 + $0x50] sm:$0xff]
        %v1179 = vld [vmem:[#allocation10 + $0x58] sm:$0xff]
        %v1180 = vld [vmem:[#allocation10 + $0x60] sm:$0xff]
        %v1181 = vld [vmem:[#allocation10 + $0x68] sm:$0xff]
        %v1182 = vld [vmem:[#allocation10 + $0x70] sm:$0xff]
        %v1183 = vld [vmem:[#allocation10 + $0x78] sm:$0xff]
        %v1184 = vld [vmem:[%s9] sm:$0x3]
        %v1186 = vlaneseq
        %v1187 = vshrl.u32 %v1186, 7
        %v1188 = vsub.s32 0, %v1187
        %v1189 = vrot.slane %v1184, %v1188
        %v1190 = vlaneseq
        %v1191 = vshrl.u32 %v1190, 7
        %v1192 = vsub.s32 1, %v1191
        %v1193 = vrot.slane %v1184, %v1192
        %v1212 = vunpack.c.l.b16 %v1168
        %v1213 = vunpack.c.h.b16 %v1168
        %v1214 = vunpack.c.l.b16 %v1169
        %v1215 = vunpack.c.h.b16 %v1169
        %v1216 = vunpack.c.l.b16 %v1170
        %v1217 = vunpack.c.h.b16 %v1170
        %v1218 = vunpack.c.l.b16 %v1171
        %v1219 = vunpack.c.h.b16 %v1171
        %v1220 = vunpack.c.l.b16 %v1172
        %v1221 = vunpack.c.h.b16 %v1172
        %v1222 = vunpack.c.l.b16 %v1173
        %v1223 = vunpack.c.h.b16 %v1173
        %v1224 = vunpack.c.l.b16 %v1174
        %v1225 = vunpack.c.h.b16 %v1174
        %v1226 = vunpack.c.l.b16 %v1175
        %v1227 = vunpack.c.h.b16 %v1175
        %v1228 = vunpack.c.l.b16 %v1176
        %v1229 = vunpack.c.h.b16 %v1176
        %v1230 = vunpack.c.l.b16 %v1177
        %v1231 = vunpack.c.h.b16 %v1177
        %v1232 = vunpack.c.l.b16 %v1178
        %v1233 = vunpack.c.h.b16 %v1178
        %v1234 = vunpack.c.l.b16 %v1179
        %v1235 = vunpack.c.h.b16 %v1179
        %v1236 = vunpack.c.l.b16 %v1180
        %v1237 = vunpack.c.h.b16 %v1180
        %v1238 = vunpack.c.l.b16 %v1181
        %v1239 = vunpack.c.h.b16 %v1181
        %v1240 = vunpack.c.l.b16 %v1182
        %v1241 = vunpack.c.h.b16 %v1182
        %v1242 = vunpack.c.l.b16 %v1183
        %v1243 = vunpack.c.h.b16 %v1183
        %v1244 = vpack.c.b16 %v1214, %v1212
        %v1245 = vpack.c.b16 %v1215, %v1213
        %v1246 = vpack.c.b16 %v1218, %v1216
        %v1247 = vpack.c.b16 %v1219, %v1217
        %v1248 = vpack.c.b16 %v1222, %v1220
        %v1249 = vpack.c.b16 %v1223, %v1221
        %v1250 = vpack.c.b16 %v1226, %v1224
        %v1251 = vpack.c.b16 %v1227, %v1225
        %v1252 = vpack.c.b16 %v1230, %v1228
        %v1253 = vpack.c.b16 %v1231, %v1229
        %v1254 = vpack.c.b16 %v1234, %v1232
        %v1255 = vpack.c.b16 %v1235, %v1233
        %v1256 = vpack.c.b16 %v1238, %v1236
        %v1257 = vpack.c.b16 %v1239, %v1237
        %v1258 = vpack.c.b16 %v1242, %v1240
        %v1259 = vpack.c.b16 %v1243, %v1241
        %1276 = vmatprep.subr.bf16.mxu0 %v1245
        %1277 = vmatpush1.bf16.msra.mxu0 %v1244
        %1278 = vmatprep.subr.bf16.mxu0 %v1247
        %1279 = vmatpush1.bf16.msra.mxu0 %v1246
        %1280 = vmatprep.subr.bf16.mxu0 %v1249
        %1281 = vmatpush1.bf16.msra.mxu0 %v1248
        %1282 = vmatprep.subr.bf16.mxu0 %v1251
        %1283 = vmatpush1.bf16.msra.mxu0 %v1250
        %1284 = vmatprep.subr.bf16.mxu0 %v1253
        %1285 = vmatpush1.bf16.msra.mxu0 %v1252
        %1286 = vmatprep.subr.bf16.mxu0 %v1255
        %1287 = vmatpush1.bf16.msra.mxu0 %v1254
        %1288 = vmatprep.subr.bf16.mxu0 %v1257
        %1289 = vmatpush1.bf16.msra.mxu0 %v1256
        %1290 = vmatprep.subr.bf16.mxu0 %v1259
        %1291 = vmatpush1.bf16.msra.mxu0 %v1258
        %1292 = vmatprep.subr.bf16.mxu0 0
        %1293 = vmatpush1.bf16.msra.mxu0 0
        %1294 = vmatprep.subr.bf16.mxu0 0
        %1295 = vmatpush1.bf16.msra.mxu0 0
        %1296 = vmatprep.subr.bf16.mxu0 0
        %1297 = vmatpush1.bf16.msra.mxu0 0
        %1298 = vmatprep.subr.bf16.mxu0 0
        %1299 = vmatpush1.bf16.msra.mxu0 0
        %1300 = vmatprep.subr.bf16.mxu0 0
        %1301 = vmatpush1.bf16.msra.mxu0 0
        %1302 = vmatprep.subr.bf16.mxu0 0
        %1303 = vmatpush1.bf16.msra.mxu0 0
        %1304 = vmatprep.subr.bf16.mxu0 0
        %1305 = vmatpush1.bf16.msra.mxu0 0
        %1306 = vmatprep.subr.bf16.mxu0 0
        %1307 = vmatpush1.bf16.msra.mxu0 0
        %1308 = vmatprep.mubr.bf16.mxu0 0
        %1309 = vmatmul.mubr.bf16.gmra.mrb[0].mxu0 %v1167
        %v1310 = vpop.f32.mrb[0].mxu0
        %v1311 = vadd.f32 %v1189, %v1310
        %v1312 = vpop.f32.mrb[0].mxu0
        %v1313 = vadd.f32 %v1193, %v1312
        %v1314 = vpop.f32.mrb[0].mxu0
        %v1315 = vadd.f32 %v1189, %v1314
        %v1316 = vpop.f32.mrb[0].mxu0
        %v1317 = vadd.f32 %v1193, %v1316
        %1318 = vdwg.mxu0
        %v1319 = vmul.f32 %v1311, %v1311
        %v1320 = vmul.f32 %v1313, %v1313
        %v1321 = vmul.f32 %v1315, %v1315
        %v1322 = vmul.f32 %v1317, %v1317
        %v1323 = vmul.f32 %v1311, %v1319
        %v1324 = vmul.f32 %v1313, %v1320
        %v1325 = vmul.f32 %v1315, %v1321
        %v1326 = vmul.f32 %v1317, %v1322
        %v1327 = vmul.f32 %v1323, 0.044715
        %v1328 = vmul.f32 %v1324, 0.044715
        %v1329 = vmul.f32 %v1325, 0.044715
        %v1330 = vmul.f32 %v1326, 0.044715
        %v1331 = vadd.f32 %v1311, %v1327
        %v1332 = vadd.f32 %v1313, %v1328
        %v1333 = vadd.f32 %v1315, %v1329
        %v1334 = vadd.f32 %v1317, %v1330
        %v1335 = vmul.f32 %v1331, 0.7978846
        %v1336 = vmul.f32 %v1332, 0.7978846
        %v1337 = vmul.f32 %v1333, 0.7978846
        %v1338 = vmul.f32 %v1334, 0.7978846
        %v1339 = vtanh.pop %v1335
        %v1340 = vtanh.pop %v1336
        %v1341 = vtanh.pop %v1337
        %v1342 = vtanh.pop %v1338
        %v1343 = vadd.f32 %v1339, 1.0
        %v1344 = vadd.f32 %v1340, 1.0
        %v1345 = vadd.f32 %v1341, 1.0
        %v1346 = vadd.f32 %v1342, 1.0
        %v1347 = vmul.f32 %v1343, 0.5
        %v1348 = vmul.f32 %v1344, 0.5
        %v1349 = vmul.f32 %v1345, 0.5
        %v1350 = vmul.f32 %v1346, 0.5
        %v1351 = vmul.f32 %v1311, %v1347
        %v1352 = vmul.f32 %v1313, %v1348
        %v1353 = vmul.f32 %v1315, %v1349
        %v1354 = vmul.f32 %v1317, %v1350
        %v1355 = vpack.c.bf16 %v1353, %v1351
        %v1356 = vpack.c.bf16 %v1354, %v1352
        %v1357 = vld [vmem:[#allocation12] sm:$0xf]
        %v1358 = vld [vmem:[#allocation12 + $0x4] sm:$0xf]
        %v1359 = vld [vmem:[#allocation12 + $0x8] sm:$0xf]
        %v1360 = vld [vmem:[#allocation12 + $0xc] sm:$0xf]
        %v1361 = vld [vmem:[#allocation12 + $0x10] sm:$0xf]
        %v1362 = vld [vmem:[#allocation12 + $0x14] sm:$0xf]
        %v1363 = vld [vmem:[#allocation12 + $0x18] sm:$0xf]
        %v1364 = vld [vmem:[#allocation12 + $0x1c] sm:$0xf]
        %v1365 = vld [vmem:[#allocation12 + $0x20] sm:$0xf]
        %v1366 = vld [vmem:[#allocation12 + $0x24] sm:$0xf]
        %v1367 = vld [vmem:[#allocation12 + $0x28] sm:$0xf]
        %v1368 = vld [vmem:[#allocation12 + $0x2c] sm:$0xf]
        %v1369 = vld [vmem:[#allocation12 + $0x30] sm:$0xf]
        %v1370 = vld [vmem:[#allocation12 + $0x34] sm:$0xf]
        %v1371 = vld [vmem:[#allocation12 + $0x38] sm:$0xf]
        %v1372 = vld [vmem:[#allocation12 + $0x3c] sm:$0xf]
        %v1373 = vld [vmem:[#allocation12 + $0x40] sm:$0xf]
        %v1374 = vld [vmem:[#allocation12 + $0x44] sm:$0xf]
        %v1375 = vld [vmem:[#allocation12 + $0x48] sm:$0xf]
        %v1376 = vld [vmem:[#allocation12 + $0x4c] sm:$0xf]
        %v1377 = vld [vmem:[#allocation12 + $0x50] sm:$0xf]
        %v1378 = vld [vmem:[#allocation12 + $0x54] sm:$0xf]
        %v1379 = vld [vmem:[#allocation12 + $0x58] sm:$0xf]
        %v1380 = vld [vmem:[#allocation12 + $0x5c] sm:$0xf]
        %v1381 = vld [vmem:[#allocation12 + $0x60] sm:$0xf]
        %v1382 = vld [vmem:[#allocation12 + $0x64] sm:$0xf]
        %v1383 = vld [vmem:[#allocation12 + $0x68] sm:$0xf]
        %v1384 = vld [vmem:[#allocation12 + $0x6c] sm:$0xf]
        %v1385 = vld [vmem:[#allocation12 + $0x70] sm:$0xf]
        %v1386 = vld [vmem:[#allocation12 + $0x74] sm:$0xf]
        %v1387 = vld [vmem:[#allocation12 + $0x78] sm:$0xf]
        %v1388 = vld [vmem:[#allocation12 + $0x7c] sm:$0xf]
        %v1421 = vunpack.c.l.b16 %v1357
        %v1422 = vunpack.c.l.b16 %v1358
        %v1423 = vunpack.c.l.b16 %v1359
        %v1424 = vunpack.c.l.b16 %v1360
        %v1425 = vunpack.c.l.b16 %v1361
        %v1426 = vunpack.c.l.b16 %v1362
        %v1427 = vunpack.c.l.b16 %v1363
        %v1428 = vunpack.c.l.b16 %v1364
        %v1429 = vunpack.c.l.b16 %v1365
        %v1430 = vunpack.c.l.b16 %v1366
        %v1431 = vunpack.c.l.b16 %v1367
        %v1432 = vunpack.c.l.b16 %v1368
        %v1433 = vunpack.c.l.b16 %v1369
        %v1434 = vunpack.c.l.b16 %v1370
        %v1435 = vunpack.c.l.b16 %v1371
        %v1436 = vunpack.c.l.b16 %v1372
        %v1437 = vunpack.c.l.b16 %v1373
        %v1438 = vunpack.c.l.b16 %v1374
        %v1439 = vunpack.c.l.b16 %v1375
        %v1440 = vunpack.c.l.b16 %v1376
        %v1441 = vunpack.c.l.b16 %v1377
        %v1442 = vunpack.c.l.b16 %v1378
        %v1443 = vunpack.c.l.b16 %v1379
        %v1444 = vunpack.c.l.b16 %v1380
        %v1445 = vunpack.c.l.b16 %v1381
        %v1446 = vunpack.c.l.b16 %v1382
        %v1447 = vunpack.c.l.b16 %v1383
        %v1448 = vunpack.c.l.b16 %v1384
        %v1449 = vunpack.c.l.b16 %v1385
        %v1450 = vunpack.c.l.b16 %v1386
        %v1451 = vunpack.c.l.b16 %v1387
        %v1452 = vunpack.c.l.b16 %v1388
        %v1453 = vpack.c.b16 %v1422, %v1421
        %v1454 = vpack.c.b16 %v1424, %v1423
        %v1455 = vpack.c.b16 %v1426, %v1425
        %v1456 = vpack.c.b16 %v1428, %v1427
        %v1457 = vpack.c.b16 %v1430, %v1429
        %v1458 = vpack.c.b16 %v1432, %v1431
        %v1459 = vpack.c.b16 %v1434, %v1433
        %v1460 = vpack.c.b16 %v1436, %v1435
        %v1461 = vpack.c.b16 %v1438, %v1437
        %v1462 = vpack.c.b16 %v1440, %v1439
        %v1463 = vpack.c.b16 %v1442, %v1441
        %v1464 = vpack.c.b16 %v1444, %v1443
        %v1465 = vpack.c.b16 %v1446, %v1445
        %v1466 = vpack.c.b16 %v1448, %v1447
        %v1467 = vpack.c.b16 %v1450, %v1449
        %v1468 = vpack.c.b16 %v1452, %v1451
        %1485 = vmatprep.subr.bf16.mxu0 0
        %1486 = vmatpush1.bf16.msra.mxu0 %v1453
        %1487 = vmatprep.subr.bf16.mxu0 0
        %1488 = vmatpush1.bf16.msra.mxu0 %v1454
        %1489 = vmatprep.subr.bf16.mxu0 0
        %1490 = vmatpush1.bf16.msra.mxu0 %v1455
        %1491 = vmatprep.subr.bf16.mxu0 0
        %1492 = vmatpush1.bf16.msra.mxu0 %v1456
        %1493 = vmatprep.subr.bf16.mxu0 0
        %1494 = vmatpush1.bf16.msra.mxu0 %v1457
        %1495 = vmatprep.subr.bf16.mxu0 0
        %1496 = vmatpush1.bf16.msra.mxu0 %v1458
        %1497 = vmatprep.subr.bf16.mxu0 0
        %1498 = vmatpush1.bf16.msra.mxu0 %v1459
        %1499 = vmatprep.subr.bf16.mxu0 0
        %1500 = vmatpush1.bf16.msra.mxu0 %v1460
        %1501 = vmatprep.subr.bf16.mxu0 0
        %1502 = vmatpush1.bf16.msra.mxu0 %v1461
        %1503 = vmatprep.subr.bf16.mxu0 0
        %1504 = vmatpush1.bf16.msra.mxu0 %v1462
        %1505 = vmatprep.subr.bf16.mxu0 0
        %1506 = vmatpush1.bf16.msra.mxu0 %v1463
        %1507 = vmatprep.subr.bf16.mxu0 0
        %1508 = vmatpush1.bf16.msra.mxu0 %v1464
        %1509 = vmatprep.subr.bf16.mxu0 0
        %1510 = vmatpush1.bf16.msra.mxu0 %v1465
        %1511 = vmatprep.subr.bf16.mxu0 0
        %1512 = vmatpush1.bf16.msra.mxu0 %v1466
        %1513 = vmatprep.subr.bf16.mxu0 0
        %1514 = vmatpush1.bf16.msra.mxu0 %v1467
        %1515 = vmatprep.subr.bf16.mxu0 0
        %1516 = vmatpush1.bf16.msra.mxu0 %v1468
        %1517 = vmatprep.mubr.bf16.mxu0 %v1356
        %1518 = vmatmul.mubr.bf16.gmra.mrb[0].mxu0 %v1355
        %v1519 = vpop.f32.mrb[0].mxu0
        %v1520 = vadd.f32 0.0, %v1519
        %v1521 = vpop.f32.mrb[0].mxu0
        %v1522 = vpop.f32.mrb[0].mxu0
        %v1523 = vadd.f32 0.0, %v1522
        %v1524 = vpop.f32.mrb[0].mxu0
        %1525 = vdwg.mxu0
        %v1526 = vadd.f32 %v1125, %v1520
        %v1527 = vadd.f32 %v1126, %v1523
        %v1528 = vld [vmem:[%s11] sm:$0x1]
        %v1530 = vlaneseq
        %v1531 = vshrl.u32 %v1530, 7
        %v1532 = vsub.s32 0, %v1531
        %v1533 = vrot.slane %v1528, %v1532
        %v1535 = vadd.f32 %v1526, %v1533
        %v1536 = vadd.f32 %v1527, %v1533
        %1537 = vst [vmem:[%s498] sm:$0xff] %v1535
        %1538 = vst [vmem:[%s498 + $0x8] sm:$0xff] %v1536
        %s1539 = smul.u32 %s40, 2
        %s1540 = sld [smem:[#allocation3 + %s1539]]
        %s1541 = scalar_lea.vmem %s498, %s1540 [#allocation13]
        %v1542 = vld [vmem:[%s1541] sm:$0x1]
        %1543 = vst [vmem:[%s505] sm:$0x1] %v1542
        %s1544 = sadd.s32 %s1539, 1
        %s1545 = sld [smem:[#allocation3 + %s1544]]
        %s1546 = sadd.s32 %s1545, 8
        %s1547 = scalar_lea.vmem %s498, %s1546 [#allocation13]
        %v1548 = vld [vmem:[%s1547] sm:$0x1]
        %1549 = vst [vmem:[%s505 + $0x1] sm:$0x1] %v1548
        %s1550 = sand.u32 %s284, 1
        %s1551 = scalar_lea.sflag [#allocation6], %s1550
        %s1552 = sand.u32 %s284, 1
        %s1553 = smul.addr %s1552, 16
        %s1554 = scalar_lea.vmem [#allocation13], %s1553
        %s1555 = sand.u32 %s310, 1
        %s1556 = scalar_lea.sflag [#allocation15], %s1555
        %s1557 = sand.u32 %s310, 1
        %s1558 = smul.addr %s1557, 2
        %s1559 = scalar_lea.vmem [#allocation14], %s1558
        // Predicated region
        $region85: #{tpu_custom_call.1} parent=63 // pred_check
          %p1560 = pneg %p294
        $region86: #{tpu_custom_call.1} parent=63 // pred_check_branch
          %1562 = sbr.rel (%p1560) target = $region88
        $region87: #{tpu_custom_call.1} parent=63 // pred_region
          %s1563 = smul.u32 2, %s40
          %s1565 = ssub.s32 256, 256
          %1566 = vsyncadd %s1551, %s1565
          %s1567 = smul.addr %s1563, 128
          %s1568 = scalar_lea.hbm %s12, %s1567
          %s1569 = sshll.u32 %s1554, 4
          %s1570 = int_to_ptr.vmem [resolvable:$true] %s1569
          %1575 = dma.vmem_to_hbm [thread:$0]  %s1570, 256, %s1568, %s1551, 128, 128, 8
        $region88: #{tpu_custom_call.1} parent=63 // pred_fallthru
          _
        // Predicated region
        $region89: #{tpu_custom_call.1} parent=63 // pred_check
          %p1576 = pneg %p320
        $region90: #{tpu_custom_call.1} parent=63 // pred_check_branch
          %1578 = sbr.rel (%p1576) target = $region92
        $region91: #{tpu_custom_call.1} parent=63 // pred_region
          %s1580 = ssub.s32 32, 32
          %1581 = vsyncadd %s1556, %s1580
          %s1582 = smul.addr %s40, 32
          %s1583 = scalar_lea.hbm %s13, %s1582
          %s1585 = sshll.u32 %s1559, 4
          %s1586 = int_to_ptr.vmem [resolvable:$true] %s1585
          %1588 = dma.vmem_to_hbm [thread:$0]  %s1586, 32, %s1583, %s1556
        $region92: #{tpu_custom_call.1} parent=63 // pred_fallthru
          _
      $region64: #{tpu_custom_call.1} parent=5 // pred_fallthru
        _
      %p1589 = scmp.le.s32.totalorder 2, %s35
      // Predicated region
      $region93: #{tpu_custom_call.1} parent=5 // pred_check
        %p1590 = pneg %p1589
      $region94: #{tpu_custom_call.1} parent=5 // pred_check_branch
        %1592 = sbr.rel (%p1590) target = $region96
      $region95: #{tpu_custom_call.1} parent=5 // pred_region
        %s1593 = ssub.s32 %s35, 2
        // Predicated region
        $region97: #{tpu_custom_call.1} parent=95 // pred_check
          %p1594 = pneg %p300
        $region98: #{tpu_custom_call.1} parent=95 // pred_check_branch
          %1596 = sbr.rel (%p1594) target = $region100
        $region99: #{tpu_custom_call.1} parent=95 // pred_region
          %s1597 = sand.u32 %s285, 1
          %s1598 = scalar_lea.sflag [#allocation6], %s1597
          %s1599 = sand.u32 %s285, 1
          %s1600 = smul.addr %s1599, 16
          %s1601 = scalar_lea.vmem [#allocation13], %s1600
          %1602 = dma.done %s1598, 256
        $region100: #{tpu_custom_call.1} parent=95 // pred_fallthru
          _
        // Predicated region
        $region101: #{tpu_custom_call.1} parent=95 // pred_check
          %p1603 = pneg %p326
        $region102: #{tpu_custom_call.1} parent=95 // pred_check_branch
          %1605 = sbr.rel (%p1603) target = $region104
        $region103: #{tpu_custom_call.1} parent=95 // pred_region
          %s1606 = sand.u32 %s311, 1
          %s1607 = scalar_lea.sflag [#allocation15], %s1606
          %s1608 = sand.u32 %s311, 1
          %s1609 = smul.addr %s1608, 2
          %s1610 = scalar_lea.vmem [#allocation14], %s1609
          %1611 = dma.done %s1607, 32
        $region104: #{tpu_custom_call.1} parent=95 // pred_fallthru
          _
      $region96: #{tpu_custom_call.1} parent=5 // pred_fallthru
        _
    $region6: #{tpu_custom_call.1} parent=1 // loop_footer
      %s39 = sadd.s32 1, %s35
    $region7: #{tpu_custom_call.1} parent=1 // loop_footer_branch
      %34 = sbr.rel target = $region3
    $region8: #{tpu_custom_call.1} parent=1 // loop_exit
      _
    %1612 = vsyncpa [#allocation5], 1
    %s1613 = scalar_lea.sflag [#allocation5], 1
    %1614 = vsyncpa %s1613, 1
    %1615 = vsyncpa [#allocation8], 1
    %1616 = vsyncpa [#allocation11], 1
    %1617 = vsyncpa [#allocation6], 1
    %s1618 = scalar_lea.sflag [#allocation6], 1
    %1619 = vsyncpa %s1618, 1
    %1620 = vsyncpa [#allocation15], 1
    %s1621 = scalar_lea.sflag [#allocation15], 1
    %1622 = vsyncpa %s1621, 1

</llo_original>
